<compile_context>
chip_gen: v6e
topology: v6e:2x2x1
jax: 0.10.0
libtpu: 0.0.40
codegen_flags: <defaults>
</compile_context>

<pallas_src>
import jax
import jax.numpy as jnp
from jax.experimental import pallas as pl
from jax.experimental.pallas import tpu as pltpu


# ----------------------------------------------------------------------------
# Kernel: one batch tile of the fused MLP. All weights are VMEM-resident
# (constant block index across the batch grid); only x / out tiles pipeline.
# ----------------------------------------------------------------------------
def mlp_kernel(x_ref,
               w1_ref, c1_ref, w2_ref, c2_ref,
               w3_ref, c3_ref, w4_ref, c4_ref,
               w5_ref, b5_ref,
               o_ref):
    def lin_relu(h_bf16, w_ref, c_ref):
        # (Linear * BN-scale) folded into w; (bias*scale + shift) folded into c.
        z = jnp.dot(h_bf16, w_ref[...], preferred_element_type=jnp.float32)
        z = jnp.maximum(z + c_ref[...], 0.0)       # Dropout = identity (eval)
        return z.astype(jnp.bfloat16)

    h = x_ref[...].astype(jnp.bfloat16)
    h = lin_relu(h, w1_ref, c1_ref)   # input -> 512
    h = lin_relu(h, w2_ref, c2_ref)   # 512   -> 256
    h = lin_relu(h, w3_ref, c3_ref)   # 256   -> 128
    h = lin_relu(h, w4_ref, c4_ref)   # 128   -> 64
    # Final Linear(64 -> 1): multiply + lane reduce on VPU/XLU (MXU-hostile shape).
    out = jnp.sum(h.astype(jnp.float32) * w5_ref[...], axis=-1, keepdims=True)
    out = out + b5_ref[...]
    o_ref[...] = out.astype(o_ref.dtype)


# ----------------------------------------------------------------------------
# Wrapper: batch-tiled pallas_call.
# ----------------------------------------------------------------------------
def deep_hybrid_recommender_forward(x, params, *, tile_b=256):
    """x: (B, input_size) float32. params: 10 folded arrays (see make_params)."""
    B, input_size = x.shape

    # Pad the batch to a multiple of the tile (padded rows are sliced off).
    pad = (-B) % tile_b
    if pad:
        x = jnp.pad(x, ((0, pad), (0, 0)))
    Bp = B + pad
    grid = (Bp // tile_b,)

    # Weights/biases: full-array blocks, constant index_map -> VMEM-resident.
    weight_specs = [pl.BlockSpec(p.shape, lambda i: (0, 0)) for p in params]

    dims = [input_size, 512, 256, 128, 64, 1]
    flops = 2 * Bp * sum(dims[l] * dims[l + 1] for l in range(5))
    param_bytes = sum(int(p.size) * p.dtype.itemsize for p in params)
    bytes_accessed = param_bytes + Bp * input_size * 4 + Bp * 4

    out = pl.pallas_call(
        mlp_kernel,
        out_shape=jax.ShapeDtypeStruct((Bp, 1), jnp.float32),
        grid=grid,
        in_specs=[pl.BlockSpec((tile_b, input_size), lambda i: (i, 0))]
                 + weight_specs,
        out_specs=pl.BlockSpec((tile_b, 1), lambda i: (i, 0)),
        compiler_params=pltpu.CompilerParams(
            dimension_semantics=("parallel",)),
        cost_estimate=pl.CostEstimate(
            flops=flops, transcendentals=0, bytes_accessed=bytes_accessed),
    )(x, *params)
    return out[:B]


# ----------------------------------------------------------------------------
# Deterministic parameter construction + host-side BN folding.
# Returns 10 arrays: [W1', c1, W2', c2, W3', c3, W4', c4, w5_row, b5]
#   W_l' (d_in, d_out) bf16, c_l (1, d_out) f32, w5_row (1, 64) f32, b5 (1,1) f32
# ----------------------------------------------------------------------------
def make_params(key, input_size):
    dims = [input_size, 512, 256, 128, 64, 1]
    eps = 1e-5
    params = []
    keys = jax.random.split(key, 32)
    ki = 0
    for layer in range(5):
        d_in, d_out = dims[layer], dims[layer + 1]
        w = jax.random.normal(keys[ki], (d_in, d_out), jnp.float32) * 0.05
        ki += 1
        b = jax.random.normal(keys[ki], (1, d_out), jnp.float32) * 0.05
        ki += 1
        if layer < 4:  # Linear followed by BatchNorm1d -> fold BN into W, b.
            gamma = 1.0 + 0.1 * jax.random.normal(keys[ki], (1, d_out), jnp.float32)
            ki += 1
            beta = 0.1 * jax.random.normal(keys[ki], (1, d_out), jnp.float32)
            ki += 1
            run_mean = 0.1 * jax.random.normal(keys[ki], (1, d_out), jnp.float32)
            ki += 1
            run_var = jnp.abs(
                1.0 + 0.1 * jax.random.normal(keys[ki], (1, d_out), jnp.float32))
            ki += 1
            scale = gamma / jnp.sqrt(run_var + eps)        # (1, d_out)
            shift = beta - run_mean * scale                # (1, d_out)
            w_folded = (w * scale).astype(jnp.bfloat16)    # column-wise fold
            c_folded = b * scale + shift                   # f32 epilogue bias
            params.extend([w_folded, c_folded])
        else:          # Final Linear(64 -> 1): pre-transpose for VPU reduce.
            params.extend([w.T, b])                        # (1, 64) f32, (1, 1) f32
    return params


# Pure-JAX reference with identical math/precision (bf16 weights/activations,
# f32 MXU accumulation, f32 epilogue).
def reference_forward(x, params):
    h = x.astype(jnp.bfloat16)
    for layer in range(4):
        w, c = params[2 * layer], params[2 * layer + 1]
        z = jnp.dot(h, w, preferred_element_type=jnp.float32)
        h = jnp.maximum(z + c, 0.0).astype(jnp.bfloat16)
    w5_row, b5 = params[8], params[9]
    return jnp.sum(h.astype(jnp.float32) * w5_row, axis=-1, keepdims=True) + b5


if __name__ == "__main__":
    input_size = 32
    batch = 500        # deliberately not a multiple of TILE_B (exercises padding)
    tile_b = 256

    key = jax.random.PRNGKey(0)
    kx, kp = jax.random.split(key)
    x = jax.random.normal(kx, (batch, input_size), jnp.float32)
    params = make_params(kp, input_size)

    out = deep_hybrid_recommender_forward(x, params, tile_b=tile_b)
    out = jax.block_until_ready(out)

    ref = reference_forward(x, params)
    assert out.shape == (batch, 1)
    assert jnp.allclose(out, ref, atol=2e-3, rtol=2e-3), "mismatch vs reference"

    print("KERNEL_OK")
</pallas_src>

<mosaic_0001>
module attributes {stable_mosaic.version = 11 : i64} {
  func.func @mlp_kernel(%arg0: i32, %arg1: memref<256x32xf32, #tpu.memory_space<vmem>>, %arg2: memref<32x512xbf16, #tpu.memory_space<vmem>>, %arg3: memref<1x512xf32, #tpu.memory_space<vmem>>, %arg4: memref<512x256xbf16, #tpu.memory_space<vmem>>, %arg5: memref<1x256xf32, #tpu.memory_space<vmem>>, %arg6: memref<256x128xbf16, #tpu.memory_space<vmem>>, %arg7: memref<1x128xf32, #tpu.memory_space<vmem>>, %arg8: memref<128x64xbf16, #tpu.memory_space<vmem>>, %arg9: memref<1x64xf32, #tpu.memory_space<vmem>>, %arg10: memref<1x64xf32, #tpu.memory_space<vmem>>, %arg11: memref<1x1xf32, #tpu.memory_space<vmem>>, %arg12: memref<256x1xf32, #tpu.memory_space<vmem>>) attributes {dimension_semantics = [#tpu.dimension_semantics<parallel>], iteration_bounds = array<i64: 2>, scalar_prefetch = 0 : i64, scratch_operands = 0 : i64, tpu.core_type = #tpu.core_type<tc>, window_params = [{transform_indices = @transform_0, window_bounds = array<i64: 256, 32>}, {pipeline_mode = #tpu.pipeline_mode<synchronous>, transform_indices = @transform_1, window_bounds = array<i64: 32, 512>}, {pipeline_mode = #tpu.pipeline_mode<synchronous>, transform_indices = @transform_2, window_bounds = array<i64: 1, 512>}, {pipeline_mode = #tpu.pipeline_mode<synchronous>, transform_indices = @transform_3, window_bounds = array<i64: 512, 256>}, {pipeline_mode = #tpu.pipeline_mode<synchronous>, transform_indices = @transform_4, window_bounds = array<i64: 1, 256>}, {pipeline_mode = #tpu.pipeline_mode<synchronous>, transform_indices = @transform_5, window_bounds = array<i64: 256, 128>}, {pipeline_mode = #tpu.pipeline_mode<synchronous>, transform_indices = @transform_6, window_bounds = array<i64: 1, 128>}, {pipeline_mode = #tpu.pipeline_mode<synchronous>, transform_indices = @transform_7, window_bounds = array<i64: 128, 64>}, {pipeline_mode = #tpu.pipeline_mode<synchronous>, transform_indices = @transform_8, window_bounds = array<i64: 1, 64>}, {pipeline_mode = #tpu.pipeline_mode<synchronous>, transform_indices = @transform_9, window_bounds = array<i64: 1, 64>}, {pipeline_mode = #tpu.pipeline_mode<synchronous>, transform_indices = @transform_10, window_bounds = array<i64: 1, 1>}, {transform_indices = @transform_11, window_bounds = array<i64: 256, 1>}]} {
    %c0 = arith.constant 0 : index
    %c0_0 = arith.constant 0 : index
    %0 = vector.load %arg1[%c0, %c0_0] : memref<256x32xf32, #tpu.memory_space<vmem>>, vector<256x32xf32>
    %1 = arith.truncf %0 : vector<256x32xf32> to vector<256x32xbf16>
    %c0_1 = arith.constant 0 : index
    %c0_2 = arith.constant 0 : index
    %2 = vector.load %arg2[%c0_1, %c0_2] : memref<32x512xbf16, #tpu.memory_space<vmem>>, vector<32x512xbf16>
    %cst = arith.constant dense<0.000000e+00> : vector<256x512xf32>
    %3 = tpu.matmul %1, %2, %cst {dimension_numbers = #tpu.dot_dimension_numbers<[1], [0], [0], [1], [0, 0, 1, 1], [], []>} : vector<256x32xbf16>, vector<32x512xbf16>, vector<256x512xf32> -> vector<256x512xf32>
    %c0_3 = arith.constant 0 : index
    %c0_4 = arith.constant 0 : index
    %4 = vector.load %arg3[%c0_3, %c0_4] : memref<1x512xf32, #tpu.memory_space<vmem>>, vector<1x512xf32>
    %5 = vector.broadcast %4 : vector<1x512xf32> to vector<256x512xf32>
    %6 = arith.addf %3, %5 : vector<256x512xf32>
    %cst_5 = arith.constant 0.000000e+00 : f32
    %7 = vector.broadcast %cst_5 : f32 to vector<256x512xf32>
    %8 = arith.maximumf %6, %7 : vector<256x512xf32>
    %9 = arith.truncf %8 : vector<256x512xf32> to vector<256x512xbf16>
    %c0_6 = arith.constant 0 : index
    %c0_7 = arith.constant 0 : index
    %10 = vector.load %arg4[%c0_6, %c0_7] : memref<512x256xbf16, #tpu.memory_space<vmem>>, vector<512x256xbf16>
    %cst_8 = arith.constant dense<0.000000e+00> : vector<256x256xf32>
    %11 = tpu.matmul %9, %10, %cst_8 {dimension_numbers = #tpu.dot_dimension_numbers<[1], [0], [0], [1], [0, 0, 1, 1], [], []>} : vector<256x512xbf16>, vector<512x256xbf16>, vector<256x256xf32> -> vector<256x256xf32>
    %c0_9 = arith.constant 0 : index
    %c0_10 = arith.constant 0 : index
    %12 = vector.load %arg5[%c0_9, %c0_10] : memref<1x256xf32, #tpu.memory_space<vmem>>, vector<1x256xf32>
    %13 = vector.broadcast %12 : vector<1x256xf32> to vector<256x256xf32>
    %14 = arith.addf %11, %13 : vector<256x256xf32>
    %cst_11 = arith.constant 0.000000e+00 : f32
    %15 = vector.broadcast %cst_11 : f32 to vector<256x256xf32>
    %16 = arith.maximumf %14, %15 : vector<256x256xf32>
    %17 = arith.truncf %16 : vector<256x256xf32> to vector<256x256xbf16>
    %c0_12 = arith.constant 0 : index
    %c0_13 = arith.constant 0 : index
    %18 = vector.load %arg6[%c0_12, %c0_13] : memref<256x128xbf16, #tpu.memory_space<vmem>>, vector<256x128xbf16>
    %cst_14 = arith.constant dense<0.000000e+00> : vector<256x128xf32>
    %19 = tpu.matmul %17, %18, %cst_14 {dimension_numbers = #tpu.dot_dimension_numbers<[1], [0], [0], [1], [0, 0, 1, 1], [], []>} : vector<256x256xbf16>, vector<256x128xbf16>, vector<256x128xf32> -> vector<256x128xf32>
    %c0_15 = arith.constant 0 : index
    %c0_16 = arith.constant 0 : index
    %20 = vector.load %arg7[%c0_15, %c0_16] : memref<1x128xf32, #tpu.memory_space<vmem>>, vector<1x128xf32>
    %21 = vector.broadcast %20 : vector<1x128xf32> to vector<256x128xf32>
    %22 = arith.addf %19, %21 : vector<256x128xf32>
    %cst_17 = arith.constant 0.000000e+00 : f32
    %23 = vector.broadcast %cst_17 : f32 to vector<256x128xf32>
    %24 = arith.maximumf %22, %23 : vector<256x128xf32>
    %25 = arith.truncf %24 : vector<256x128xf32> to vector<256x128xbf16>
    %c0_18 = arith.constant 0 : index
    %c0_19 = arith.constant 0 : index
    %26 = vector.load %arg8[%c0_18, %c0_19] : memref<128x64xbf16, #tpu.memory_space<vmem>>, vector<128x64xbf16>
    %cst_20 = arith.constant dense<0.000000e+00> : vector<256x64xf32>
    %27 = tpu.matmul %25, %26, %cst_20 {dimension_numbers = #tpu.dot_dimension_numbers<[1], [0], [0], [1], [0, 0, 1, 1], [], []>} : vector<256x128xbf16>, vector<128x64xbf16>, vector<256x64xf32> -> vector<256x64xf32>
    %c0_21 = arith.constant 0 : index
    %c0_22 = arith.constant 0 : index
    %28 = vector.load %arg9[%c0_21, %c0_22] : memref<1x64xf32, #tpu.memory_space<vmem>>, vector<1x64xf32>
    %29 = vector.broadcast %28 : vector<1x64xf32> to vector<256x64xf32>
    %30 = arith.addf %27, %29 : vector<256x64xf32>
    %cst_23 = arith.constant 0.000000e+00 : f32
    %31 = vector.broadcast %cst_23 : f32 to vector<256x64xf32>
    %32 = arith.maximumf %30, %31 : vector<256x64xf32>
    %33 = arith.truncf %32 : vector<256x64xf32> to vector<256x64xbf16>
    %34 = arith.extf %33 : vector<256x64xbf16> to vector<256x64xf32>
    %c0_24 = arith.constant 0 : index
    %c0_25 = arith.constant 0 : index
    %35 = vector.load %arg10[%c0_24, %c0_25] : memref<1x64xf32, #tpu.memory_space<vmem>>, vector<1x64xf32>
    %36 = vector.broadcast %35 : vector<1x64xf32> to vector<256x64xf32>
    %37 = arith.mulf %34, %36 : vector<256x64xf32>
    %cst_26 = arith.constant dense<0.000000e+00> : vector<256xf32>
    %38 = vector.multi_reduction <add>, %37, %cst_26 [1] : vector<256x64xf32> to vector<256xf32>
    %39 = vector.shape_cast %38 : vector<256xf32> to vector<256x1xf32>
    %c0_27 = arith.constant 0 : index
    %c0_28 = arith.constant 0 : index
    %40 = vector.load %arg11[%c0_27, %c0_28] : memref<1x1xf32, #tpu.memory_space<vmem>>, vector<1x1xf32>
    %41 = vector.broadcast %40 : vector<1x1xf32> to vector<256x1xf32>
    %42 = arith.addf %39, %41 : vector<256x1xf32>
    %c0_29 = arith.constant 0 : index
    %c0_30 = arith.constant 0 : index
    %43 = vector.load %arg12[%c0_29, %c0_30] : memref<256x1xf32, #tpu.memory_space<vmem>>, vector<256x1xf32>
    tpu.vector_store %arg12[%c0_29, %c0_30], %42 {strides = array<i32>} : memref<256x1xf32, #tpu.memory_space<vmem>>, vector<256x1xf32>,
    return
  }
  func.func @transform_0(%arg0: i32) -> (i32, i32) {
    %c0_i32 = arith.constant 0 : i32
    %c0_i32_0 = arith.constant 0 : i32
    return %arg0, %c0_i32 : i32, i32
  }
  func.func @transform_1(%arg0: i32) -> (i32, i32) {
    %c0_i32 = arith.constant 0 : i32
    %c0_i32_0 = arith.constant 0 : i32
    %c0_i32_1 = arith.constant 0 : i32
    return %c0_i32, %c0_i32_0 : i32, i32
  }
  func.func @transform_2(%arg0: i32) -> (i32, i32) {
    %c0_i32 = arith.constant 0 : i32
    %c0_i32_0 = arith.constant 0 : i32
    %c0_i32_1 = arith.constant 0 : i32
    return %c0_i32, %c0_i32_0 : i32, i32
  }
  func.func @transform_3(%arg0: i32) -> (i32, i32) {
    %c0_i32 = arith.constant 0 : i32
    %c0_i32_0 = arith.constant 0 : i32
    %c0_i32_1 = arith.constant 0 : i32
    return %c0_i32, %c0_i32_0 : i32, i32
  }
  func.func @transform_4(%arg0: i32) -> (i32, i32) {
    %c0_i32 = arith.constant 0 : i32
    %c0_i32_0 = arith.constant 0 : i32
    %c0_i32_1 = arith.constant 0 : i32
    return %c0_i32, %c0_i32_0 : i32, i32
  }
  func.func @transform_5(%arg0: i32) -> (i32, i32) {
    %c0_i32 = arith.constant 0 : i32
    %c0_i32_0 = arith.constant 0 : i32
    %c0_i32_1 = arith.constant 0 : i32
    return %c0_i32, %c0_i32_0 : i32, i32
  }
  func.func @transform_6(%arg0: i32) -> (i32, i32) {
    %c0_i32 = arith.constant 0 : i32
    %c0_i32_0 = arith.constant 0 : i32
    %c0_i32_1 = arith.constant 0 : i32
    return %c0_i32, %c0_i32_0 : i32, i32
  }
  func.func @transform_7(%arg0: i32) -> (i32, i32) {
    %c0_i32 = arith.constant 0 : i32
    %c0_i32_0 = arith.constant 0 : i32
    %c0_i32_1 = arith.constant 0 : i32
    return %c0_i32, %c0_i32_0 : i32, i32
  }
  func.func @transform_8(%arg0: i32) -> (i32, i32) {
    %c0_i32 = arith.constant 0 : i32
    %c0_i32_0 = arith.constant 0 : i32
    %c0_i32_1 = arith.constant 0 : i32
    return %c0_i32, %c0_i32_0 : i32, i32
  }
  func.func @transform_9(%arg0: i32) -> (i32, i32) {
    %c0_i32 = arith.constant 0 : i32
    %c0_i32_0 = arith.constant 0 : i32
    %c0_i32_1 = arith.constant 0 : i32
    return %c0_i32, %c0_i32_0 : i32, i32
  }
  func.func @transform_10(%arg0: i32) -> (i32, i32) {
    %c0_i32 = arith.constant 0 : i32
    %c0_i32_0 = arith.constant 0 : i32
    %c0_i32_1 = arith.constant 0 : i32
    return %c0_i32, %c0_i32_0 : i32, i32
  }
  func.func @transform_11(%arg0: i32) -> (i32, i32) {
    %c0_i32 = arith.constant 0 : i32
    %c0_i32_0 = arith.constant 0 : i32
    return %arg0, %c0_i32 : i32, i32
  }
}

</mosaic_0001>

<llo_original>
// kernel: tpu_custom_call.1
$region0: #{tpu_custom_call.1}
  #allocation0 [shape = 'u32[]', space=smem, size = 0x4, offset = 0x4, fixed_abs, tag = 'smem constant byte address 0x4 - core index']
  #allocation1 [shape = 'u32[144,128]{1,0:T(1,128)}', space=vmem, size = 0x12000, scoped, tag = 'internal scratch']
  #allocation2 [shape = 'f32[1,1]{1,0:T(1,128)S(1)}', space=vmem, size = 0x200, scoped, tag = 'scoped memory for tpu_custom_call.1']
  %s0 = inlined_call_operand.vmem [shape: f32[512,32], index: 0, kind: input, shape index: {}]
  %s1 = inlined_call_operand.vmem [shape: bf16[32,512], index: 1, kind: input, shape index: {}]
  %s2 = inlined_call_operand.vmem [shape: f32[1,512], index: 2, kind: input, shape index: {}]
  %s3 = inlined_call_operand.vmem [shape: bf16[512,256], index: 3, kind: input, shape index: {}]
  %s4 = inlined_call_operand.vmem [shape: f32[1,256], index: 4, kind: input, shape index: {}]
  %s5 = inlined_call_operand.vmem [shape: bf16[256,128], index: 5, kind: input, shape index: {}]
  %s6 = inlined_call_operand.vmem [shape: f32[1,128], index: 6, kind: input, shape index: {}]
  %s7 = inlined_call_operand.vmem [shape: bf16[128,64], index: 7, kind: input, shape index: {}]
  %s8 = inlined_call_operand.vmem [shape: f32[1,64], index: 8, kind: input, shape index: {}]
  %s9 = inlined_call_operand.vmem [shape: f32[1,64], index: 9, kind: input, shape index: {}]
  %s10 = inlined_call_operand.<no memory space> [shape: f32[1,1], index: 10, kind: input, shape index: {}]
  %s11 = inlined_call_operand.vmem [shape: f32[512,1], index: 11, kind: output, shape index: {}]
  %s12 = sld [smem:[#allocation0]]
  $region77: #{tpu_custom_call.1} parent=0
    _
  %s14 = ssub.s32 1, %s12
  %s15 = scalar_select 0, %s14, %s12
  %v16 = vstv %s10
  %17 = vst [vmem:[#allocation2] sm:$0x1] %v16
  loop: start=0, step=1, limit=4
  $region2: #{tpu_custom_call.1} parent=0 // loop_pre_header
    _
  $region3: #{tpu_custom_call.1} parent=0 // loop_header
    %s19 = sphi 0, %s23
    %p20 = scmp.ge.s32.totalorder %s19, 4
    %s29 = sphi 0, %s31
    %s32 = sphi 0, %s29
    %s33 = sphi 0, %s32
    %s49 = sphi 0, %s33
    %s53 = sphi 0, %s53
    %s55 = sphi 0, %s53
    %s56 = sphi 0, %s55
    %s70 = sphi 0, %s56
    %s74 = sphi 0, %s74
    %s76 = sphi 0, %s74
    %s77 = sphi 0, %s76
    %s91 = sphi 0, %s77
    %s95 = sphi 0, %s95
    %s97 = sphi 0, %s95
    %s98 = sphi 0, %s97
    %s112 = sphi 0, %s98
    %s116 = sphi 0, %s116
    %s118 = sphi 0, %s116
    %s119 = sphi 0, %s118
    %s133 = sphi 0, %s119
    %s137 = sphi 0, %s137
    %s139 = sphi 0, %s137
    %s140 = sphi 0, %s139
    %s154 = sphi 0, %s140
    %s158 = sphi 0, %s158
    %s160 = sphi 0, %s158
    %s161 = sphi 0, %s160
    %s175 = sphi 0, %s161
    %s179 = sphi 0, %s179
    %s181 = sphi 0, %s179
    %s182 = sphi 0, %s181
    %s196 = sphi 0, %s182
    %s200 = sphi 0, %s200
    %s202 = sphi 0, %s200
    %s203 = sphi 0, %s202
    %s217 = sphi 0, %s203
    %s221 = sphi 0, %s221
    %s223 = sphi 0, %s221
    %s224 = sphi 0, %s223
    %s238 = sphi 0, %s224
    %s242 = sphi 0, %s242
    %s244 = sphi 0, %s242
    %s245 = sphi 0, %s244
    %s259 = sphi 0, %s245
    %s265 = sphi 0, %s267
    %s268 = sphi 0, %s265
    %s269 = sphi 0, %s268
    %s285 = sphi 0, %s269
  $region4: #{tpu_custom_call.1} parent=0 // loop_header_branch
    %22 = sbr.rel (%p20) target = $region8
  $region5: #{tpu_custom_call.1} parent=0 // loop_body
    %s24 = ssub.s32 %s19, 1
    %s25 = ssub.s32 %s19, 2
    %s26 = sadd.s32 %s19, 1
    %s27 = ssub.s32 %s19, %s26
    %p28 = scmp.eq.s32.totalorder %s27, 0
    %s30 = sadd.s32 %s29, 1
    %s31 = scalar_select %p28, %s29, %s30
    %p34 = pneg %p28
    %p35 = scmp.eq.s32.totalorder %s19, 1
    %p36 = por %p34, %p35
    %p37 = scmp.ne.s32.totalorder %s29, %s32
    %p38 = scmp.eq.s32.totalorder %s19, 0
    %p39 = por %p37, %p38
    %p40 = scmp.ne.s32.totalorder %s29, %s32
    %p41 = scmp.eq.s32.totalorder %s24, 1
    %p42 = por %p40, %p41
    %p43 = scmp.ne.s32.totalorder %s32, %s33
    %p44 = scmp.eq.s32.totalorder %s24, 0
    %p45 = por %p43, %p44
    %p46 = scmp.ne.s32.totalorder %s32, %s33
    %p47 = scmp.eq.s32.totalorder %s25, 1
    %p48 = por %p46, %p47
    %p50 = scmp.ne.s32.totalorder %s33, %s49
    %p51 = scmp.eq.s32.totalorder %s25, 0
    %p52 = por %p50, %p51
    %s54 = sadd.s32 %s53, 1
    %p57 = scmp.eq.s32.totalorder %s19, 1
    %p58 = scmp.ne.s32.totalorder %s53, %s55
    %p59 = scmp.eq.s32.totalorder %s19, 0
    %p60 = por %p58, %p59
    %p61 = scmp.ne.s32.totalorder %s53, %s55
    %p62 = scmp.eq.s32.totalorder %s24, 1
    %p63 = por %p61, %p62
    %p64 = scmp.ne.s32.totalorder %s55, %s56
    %p65 = scmp.eq.s32.totalorder %s24, 0
    %p66 = por %p64, %p65
    %p67 = scmp.ne.s32.totalorder %s55, %s56
    %p68 = scmp.eq.s32.totalorder %s25, 1
    %p69 = por %p67, %p68
    %p71 = scmp.ne.s32.totalorder %s56, %s70
    %p72 = scmp.eq.s32.totalorder %s25, 0
    %p73 = por %p71, %p72
    %s75 = sadd.s32 %s74, 1
    %p78 = scmp.eq.s32.totalorder %s19, 1
    %p79 = scmp.ne.s32.totalorder %s74, %s76
    %p80 = scmp.eq.s32.totalorder %s19, 0
    %p81 = por %p79, %p80
    %p82 = scmp.ne.s32.totalorder %s74, %s76
    %p83 = scmp.eq.s32.totalorder %s24, 1
    %p84 = por %p82, %p83
    %p85 = scmp.ne.s32.totalorder %s76, %s77
    %p86 = scmp.eq.s32.totalorder %s24, 0
    %p87 = por %p85, %p86
    %p88 = scmp.ne.s32.totalorder %s76, %s77
    %p89 = scmp.eq.s32.totalorder %s25, 1
    %p90 = por %p88, %p89
    %p92 = scmp.ne.s32.totalorder %s77, %s91
    %p93 = scmp.eq.s32.totalorder %s25, 0
    %p94 = por %p92, %p93
    %s96 = sadd.s32 %s95, 1
    %p99 = scmp.eq.s32.totalorder %s19, 1
    %p100 = scmp.ne.s32.totalorder %s95, %s97
    %p101 = scmp.eq.s32.totalorder %s19, 0
    %p102 = por %p100, %p101
    %p103 = scmp.ne.s32.totalorder %s95, %s97
    %p104 = scmp.eq.s32.totalorder %s24, 1
    %p105 = por %p103, %p104
    %p106 = scmp.ne.s32.totalorder %s97, %s98
    %p107 = scmp.eq.s32.totalorder %s24, 0
    %p108 = por %p106, %p107
    %p109 = scmp.ne.s32.totalorder %s97, %s98
    %p110 = scmp.eq.s32.totalorder %s25, 1
    %p111 = por %p109, %p110
    %p113 = scmp.ne.s32.totalorder %s98, %s112
    %p114 = scmp.eq.s32.totalorder %s25, 0
    %p115 = por %p113, %p114
    %s117 = sadd.s32 %s116, 1
    %p120 = scmp.eq.s32.totalorder %s19, 1
    %p121 = scmp.ne.s32.totalorder %s116, %s118
    %p122 = scmp.eq.s32.totalorder %s19, 0
    %p123 = por %p121, %p122
    %p124 = scmp.ne.s32.totalorder %s116, %s118
    %p125 = scmp.eq.s32.totalorder %s24, 1
    %p126 = por %p124, %p125
    %p127 = scmp.ne.s32.totalorder %s118, %s119
    %p128 = scmp.eq.s32.totalorder %s24, 0
    %p129 = por %p127, %p128
    %p130 = scmp.ne.s32.totalorder %s118, %s119
    %p131 = scmp.eq.s32.totalorder %s25, 1
    %p132 = por %p130, %p131
    %p134 = scmp.ne.s32.totalorder %s119, %s133
    %p135 = scmp.eq.s32.totalorder %s25, 0
    %p136 = por %p134, %p135
    %s138 = sadd.s32 %s137, 1
    %p141 = scmp.eq.s32.totalorder %s19, 1
    %p142 = scmp.ne.s32.totalorder %s137, %s139
    %p143 = scmp.eq.s32.totalorder %s19, 0
    %p144 = por %p142, %p143
    %p145 = scmp.ne.s32.totalorder %s137, %s139
    %p146 = scmp.eq.s32.totalorder %s24, 1
    %p147 = por %p145, %p146
    %p148 = scmp.ne.s32.totalorder %s139, %s140
    %p149 = scmp.eq.s32.totalorder %s24, 0
    %p150 = por %p148, %p149
    %p151 = scmp.ne.s32.totalorder %s139, %s140
    %p152 = scmp.eq.s32.totalorder %s25, 1
    %p153 = por %p151, %p152
    %p155 = scmp.ne.s32.totalorder %s140, %s154
    %p156 = scmp.eq.s32.totalorder %s25, 0
    %p157 = por %p155, %p156
    %s159 = sadd.s32 %s158, 1
    %p162 = scmp.eq.s32.totalorder %s19, 1
    %p163 = scmp.ne.s32.totalorder %s158, %s160
    %p164 = scmp.eq.s32.totalorder %s19, 0
    %p165 = por %p163, %p164
    %p166 = scmp.ne.s32.totalorder %s158, %s160
    %p167 = scmp.eq.s32.totalorder %s24, 1
    %p168 = por %p166, %p167
    %p169 = scmp.ne.s32.totalorder %s160, %s161
    %p170 = scmp.eq.s32.totalorder %s24, 0
    %p171 = por %p169, %p170
    %p172 = scmp.ne.s32.totalorder %s160, %s161
    %p173 = scmp.eq.s32.totalorder %s25, 1
    %p174 = por %p172, %p173
    %p176 = scmp.ne.s32.totalorder %s161, %s175
    %p177 = scmp.eq.s32.totalorder %s25, 0
    %p178 = por %p176, %p177
    %s180 = sadd.s32 %s179, 1
    %p183 = scmp.eq.s32.totalorder %s19, 1
    %p184 = scmp.ne.s32.totalorder %s179, %s181
    %p185 = scmp.eq.s32.totalorder %s19, 0
    %p186 = por %p184, %p185
    %p187 = scmp.ne.s32.totalorder %s179, %s181
    %p188 = scmp.eq.s32.totalorder %s24, 1
    %p189 = por %p187, %p188
    %p190 = scmp.ne.s32.totalorder %s181, %s182
    %p191 = scmp.eq.s32.totalorder %s24, 0
    %p192 = por %p190, %p191
    %p193 = scmp.ne.s32.totalorder %s181, %s182
    %p194 = scmp.eq.s32.totalorder %s25, 1
    %p195 = por %p193, %p194
    %p197 = scmp.ne.s32.totalorder %s182, %s196
    %p198 = scmp.eq.s32.totalorder %s25, 0
    %p199 = por %p197, %p198
    %s201 = sadd.s32 %s200, 1
    %p204 = scmp.eq.s32.totalorder %s19, 1
    %p205 = scmp.ne.s32.totalorder %s200, %s202
    %p206 = scmp.eq.s32.totalorder %s19, 0
    %p207 = por %p205, %p206
    %p208 = scmp.ne.s32.totalorder %s200, %s202
    %p209 = scmp.eq.s32.totalorder %s24, 1
    %p210 = por %p208, %p209
    %p211 = scmp.ne.s32.totalorder %s202, %s203
    %p212 = scmp.eq.s32.totalorder %s24, 0
    %p213 = por %p211, %p212
    %p214 = scmp.ne.s32.totalorder %s202, %s203
    %p215 = scmp.eq.s32.totalorder %s25, 1
    %p216 = por %p214, %p215
    %p218 = scmp.ne.s32.totalorder %s203, %s217
    %p219 = scmp.eq.s32.totalorder %s25, 0
    %p220 = por %p218, %p219
    %s222 = sadd.s32 %s221, 1
    %p225 = scmp.eq.s32.totalorder %s19, 1
    %p226 = scmp.ne.s32.totalorder %s221, %s223
    %p227 = scmp.eq.s32.totalorder %s19, 0
    %p228 = por %p226, %p227
    %p229 = scmp.ne.s32.totalorder %s221, %s223
    %p230 = scmp.eq.s32.totalorder %s24, 1
    %p231 = por %p229, %p230
    %p232 = scmp.ne.s32.totalorder %s223, %s224
    %p233 = scmp.eq.s32.totalorder %s24, 0
    %p234 = por %p232, %p233
    %p235 = scmp.ne.s32.totalorder %s223, %s224
    %p236 = scmp.eq.s32.totalorder %s25, 1
    %p237 = por %p235, %p236
    %p239 = scmp.ne.s32.totalorder %s224, %s238
    %p240 = scmp.eq.s32.totalorder %s25, 0
    %p241 = por %p239, %p240
    %s243 = sadd.s32 %s242, 1
    %p246 = scmp.eq.s32.totalorder %s19, 1
    %p247 = scmp.ne.s32.totalorder %s242, %s244
    %p248 = scmp.eq.s32.totalorder %s19, 0
    %p249 = por %p247, %p248
    %p250 = scmp.ne.s32.totalorder %s242, %s244
    %p251 = scmp.eq.s32.totalorder %s24, 1
    %p252 = por %p250, %p251
    %p253 = scmp.ne.s32.totalorder %s244, %s245
    %p254 = scmp.eq.s32.totalorder %s24, 0
    %p255 = por %p253, %p254
    %p256 = scmp.ne.s32.totalorder %s244, %s245
    %p257 = scmp.eq.s32.totalorder %s25, 1
    %p258 = por %p256, %p257
    %p260 = scmp.ne.s32.totalorder %s245, %s259
    %p261 = scmp.eq.s32.totalorder %s25, 0
    %p262 = por %p260, %p261
    %s263 = ssub.s32 %s19, %s26
    %p264 = scmp.eq.s32.totalorder %s263, 0
    %s266 = sadd.s32 %s265, 1
    %s267 = scalar_select %p264, %s265, %s266
    %p270 = pneg %p264
    %p271 = scmp.eq.s32.totalorder %s19, 1
    %p272 = por %p270, %p271
    %p273 = scmp.ne.s32.totalorder %s265, %s268
    %p274 = scmp.eq.s32.totalorder %s19, 0
    %p275 = por %p273, %p274
    %p276 = scmp.ne.s32.totalorder %s265, %s268
    %p277 = scmp.eq.s32.totalorder %s24, 1
    %p278 = por %p276, %p277
    %p279 = scmp.ne.s32.totalorder %s268, %s269
    %p280 = scmp.eq.s32.totalorder %s24, 0
    %p281 = por %p279, %p280
    %p282 = scmp.ne.s32.totalorder %s268, %s269
    %p283 = scmp.eq.s32.totalorder %s25, 1
    %p284 = por %p282, %p283
    %p286 = scmp.ne.s32.totalorder %s269, %s285
    %p287 = scmp.eq.s32.totalorder %s25, 0
    %p288 = por %p286, %p287
    %p289 = scmp.le.s32.totalorder 1, %s19
    %p290 = scmp.lt.s32.totalorder %s19, 3
    %p291 = pnand %p289, %p290
    %p292 = pneg %p291
    // Predicated region
    $region9: #{tpu_custom_call.1} parent=5 // pred_check
      _
    $region10: #{tpu_custom_call.1} parent=5 // pred_check_branch
      %294 = sbr.rel (%p291) target = $region12
    $region11: #{tpu_custom_call.1} parent=5 // pred_region
      %s295 = ssub.s32 %s19, 1
      // Predicated region
      $region13: #{tpu_custom_call.1} parent=11 // pred_check
        %p296 = pneg %p66
      $region14: #{tpu_custom_call.1} parent=11 // pred_check_branch
        %298 = sbr.rel (%p296) target = $region16
      $region15: #{tpu_custom_call.1} parent=11 // pred_region
        _
      $region16: #{tpu_custom_call.1} parent=11 // pred_fallthru
        _
      // Predicated region
      $region17: #{tpu_custom_call.1} parent=11 // pred_check
        %p299 = pneg %p87
      $region18: #{tpu_custom_call.1} parent=11 // pred_check_branch
        %301 = sbr.rel (%p299) target = $region20
      $region19: #{tpu_custom_call.1} parent=11 // pred_region
        _
      $region20: #{tpu_custom_call.1} parent=11 // pred_fallthru
        _
      // Predicated region
      $region21: #{tpu_custom_call.1} parent=11 // pred_check
        %p302 = pneg %p108
      $region22: #{tpu_custom_call.1} parent=11 // pred_check_branch
        %304 = sbr.rel (%p302) target = $region24
      $region23: #{tpu_custom_call.1} parent=11 // pred_region
        _
      $region24: #{tpu_custom_call.1} parent=11 // pred_fallthru
        _
      // Predicated region
      $region25: #{tpu_custom_call.1} parent=11 // pred_check
        %p305 = pneg %p129
      $region26: #{tpu_custom_call.1} parent=11 // pred_check_branch
        %307 = sbr.rel (%p305) target = $region28
      $region27: #{tpu_custom_call.1} parent=11 // pred_region
        _
      $region28: #{tpu_custom_call.1} parent=11 // pred_fallthru
        _
      // Predicated region
      $region29: #{tpu_custom_call.1} parent=11 // pred_check
        %p308 = pneg %p150
      $region30: #{tpu_custom_call.1} parent=11 // pred_check_branch
        %310 = sbr.rel (%p308) target = $region32
      $region31: #{tpu_custom_call.1} parent=11 // pred_region
        _
      $region32: #{tpu_custom_call.1} parent=11 // pred_fallthru
        _
      // Predicated region
      $region33: #{tpu_custom_call.1} parent=11 // pred_check
        %p311 = pneg %p171
      $region34: #{tpu_custom_call.1} parent=11 // pred_check_branch
        %313 = sbr.rel (%p311) target = $region36
      $region35: #{tpu_custom_call.1} parent=11 // pred_region
        _
      $region36: #{tpu_custom_call.1} parent=11 // pred_fallthru
        _
      // Predicated region
      $region37: #{tpu_custom_call.1} parent=11 // pred_check
        %p314 = pneg %p192
      $region38: #{tpu_custom_call.1} parent=11 // pred_check_branch
        %316 = sbr.rel (%p314) target = $region40
      $region39: #{tpu_custom_call.1} parent=11 // pred_region
        _
      $region40: #{tpu_custom_call.1} parent=11 // pred_fallthru
        _
      // Predicated region
      $region41: #{tpu_custom_call.1} parent=11 // pred_check
        %p317 = pneg %p213
      $region42: #{tpu_custom_call.1} parent=11 // pred_check_branch
        %319 = sbr.rel (%p317) target = $region44
      $region43: #{tpu_custom_call.1} parent=11 // pred_region
        _
      $region44: #{tpu_custom_call.1} parent=11 // pred_fallthru
        _
      // Predicated region
      $region45: #{tpu_custom_call.1} parent=11 // pred_check
        %p320 = pneg %p234
      $region46: #{tpu_custom_call.1} parent=11 // pred_check_branch
        %322 = sbr.rel (%p320) target = $region48
      $region47: #{tpu_custom_call.1} parent=11 // pred_region
        _
      $region48: #{tpu_custom_call.1} parent=11 // pred_fallthru
        _
      // Predicated region
      $region49: #{tpu_custom_call.1} parent=11 // pred_check
        %p323 = pneg %p255
      $region50: #{tpu_custom_call.1} parent=11 // pred_check_branch
        %325 = sbr.rel (%p323) target = $region52
      $region51: #{tpu_custom_call.1} parent=11 // pred_region
        _
      $region52: #{tpu_custom_call.1} parent=11 // pred_fallthru
        _
    $region12: #{tpu_custom_call.1} parent=5 // pred_fallthru
      _
    %p326 = scmp.lt.s32.totalorder %s19, 2
    // Predicated region
    $region53: #{tpu_custom_call.1} parent=5 // pred_check
      %p327 = pneg %p326
    $region54: #{tpu_custom_call.1} parent=5 // pred_check_branch
      %329 = sbr.rel (%p327) target = $region56
    $region55: #{tpu_custom_call.1} parent=5 // pred_region
      // Predicated region
      $region57: #{tpu_custom_call.1} parent=55 // pred_check
        %p330 = pneg %p39
      $region58: #{tpu_custom_call.1} parent=55 // pred_check_branch
        %332 = sbr.rel (%p330) target = $region60
      $region59: #{tpu_custom_call.1} parent=55 // pred_region
        %s333 = smul.u32 32, %s19
        %p334 = scmp.lt.s32.totalorder %s333, 63
        %s335 = scalar_select %p334, %s333, 63
        %s336 = smul.addr %s335, 8
        %s337 = scalar_lea.vmem %s0, %s336
        %s338 = smul.u32 32, %s19
      $region60: #{tpu_custom_call.1} parent=55 // pred_fallthru
        _
    $region56: #{tpu_custom_call.1} parent=5 // pred_fallthru
      _
    %p339 = scmp.le.s32.totalorder 1, %s19
    %p340 = scmp.lt.s32.totalorder %s19, 3
    %p341 = pnand %p339, %p340
    %p342 = pneg %p341
    // Predicated region
    $region61: #{tpu_custom_call.1} parent=5 // pred_check
      _
    $region62: #{tpu_custom_call.1} parent=5 // pred_check_branch
      %344 = sbr.rel (%p341) target = $region64
    $region63: #{tpu_custom_call.1} parent=5 // pred_region
      %s345 = ssub.s32 %s19, 1
      %s346 = smul.u32 32, %s24
      %p347 = scmp.lt.s32.totalorder %s346, 63
      %s348 = scalar_select %p347, %s346, 63
      %s349 = smul.addr %s348, 8
      %s350 = scalar_lea.vmem %s0, %s349
      %p351 = pneg %p45
      %p352 = pneg %p42
      %p353 = pneg %p66
      %p354 = pneg %p63
      %p355 = pneg %p87
      %p356 = pneg %p84
      %p357 = pneg %p108
      %p358 = pneg %p105
      %p359 = pneg %p129
      %p360 = pneg %p126
      %p361 = pneg %p150
      %p362 = pneg %p147
      %p363 = pneg %p171
      %p364 = pneg %p168
      %p365 = pneg %p192
      %p366 = pneg %p189
      %p367 = pneg %p213
      %p368 = pneg %p210
      %p369 = pneg %p234
      %p370 = pneg %p231
      %p371 = pneg %p255
      %p372 = pneg %p252
      %p373 = pneg %p281
      %p374 = pneg %p278
      %s375 = smul.u32 32, %s24
      %p376 = scmp.lt.s32.totalorder %s375, 63
      %s377 = scalar_select %p376, %s375, 63
      %s378 = smul.addr %s377, 8
      %s379 = scalar_lea.vmem %s11, %s378
      %s380 = smul.u32 32, %s24
      %p381 = scmp.lt.s32.totalorder %s380, 63
      %s382 = scalar_select %p381, %s380, 63
      %s383 = smul.addr %s382, 8
      %s384 = scalar_lea.vmem %s0, %s383
      %s385 = smul.u32 32, %s24
      %s386 = smul.u32 32, %s24
      %p387 = scmp.lt.s32.totalorder %s386, 63
      %s388 = scalar_select %p387, %s386, 63
      %s389 = smul.addr %s388, 8
      %s390 = scalar_lea.vmem %s11, %s389
      %s391 = smul.u32 32, %s24
      %v393 = vld [vmem:[%s384] sm:$0xff]
      %v394 = vld [vmem:[%s384 + $0x8] sm:$0xff]
      %v395 = vld [vmem:[%s384 + $0x10] sm:$0xff]
      %v396 = vld [vmem:[%s384 + $0x18] sm:$0xff]
      %v397 = vld [vmem:[%s384 + $0x20] sm:$0xff]
      %v398 = vld [vmem:[%s384 + $0x28] sm:$0xff]
      %v399 = vld [vmem:[%s384 + $0x30] sm:$0xff]
      %v400 = vld [vmem:[%s384 + $0x38] sm:$0xff]
      %v401 = vld [vmem:[%s384 + $0x40] sm:$0xff]
      %v402 = vld [vmem:[%s384 + $0x48] sm:$0xff]
      %v403 = vld [vmem:[%s384 + $0x50] sm:$0xff]
      %v404 = vld [vmem:[%s384 + $0x58] sm:$0xff]
      %v405 = vld [vmem:[%s384 + $0x60] sm:$0xff]
      %v406 = vld [vmem:[%s384 + $0x68] sm:$0xff]
      %v407 = vld [vmem:[%s384 + $0x70] sm:$0xff]
      %v408 = vld [vmem:[%s384 + $0x78] sm:$0xff]
      %v409 = vld [vmem:[%s384 + $0x80] sm:$0xff]
      %v410 = vld [vmem:[%s384 + $0x88] sm:$0xff]
      %v411 = vld [vmem:[%s384 + $0x90] sm:$0xff]
      %v412 = vld [vmem:[%s384 + $0x98] sm:$0xff]
      %v413 = vld [vmem:[%s384 + $0xa0] sm:$0xff]
      %v414 = vld [vmem:[%s384 + $0xa8] sm:$0xff]
      %v415 = vld [vmem:[%s384 + $0xb0] sm:$0xff]
      %v416 = vld [vmem:[%s384 + $0xb8] sm:$0xff]
      %v417 = vld [vmem:[%s384 + $0xc0] sm:$0xff]
      %v418 = vld [vmem:[%s384 + $0xc8] sm:$0xff]
      %v419 = vld [vmem:[%s384 + $0xd0] sm:$0xff]
      %v420 = vld [vmem:[%s384 + $0xd8] sm:$0xff]
      %v421 = vld [vmem:[%s384 + $0xe0] sm:$0xff]
      %v422 = vld [vmem:[%s384 + $0xe8] sm:$0xff]
      %v423 = vld [vmem:[%s384 + $0xf0] sm:$0xff]
      %v424 = vld [vmem:[%s384 + $0xf8] sm:$0xff]
      %v425 = vpack.c.bf16 %v394, %v393
      %v426 = vpack.c.bf16 %v396, %v395
      %v427 = vpack.c.bf16 %v398, %v397
      %v428 = vpack.c.bf16 %v400, %v399
      %v429 = vpack.c.bf16 %v402, %v401
      %v430 = vpack.c.bf16 %v404, %v403
      %v431 = vpack.c.bf16 %v406, %v405
      %v432 = vpack.c.bf16 %v408, %v407
      %v433 = vpack.c.bf16 %v410, %v409
      %v434 = vpack.c.bf16 %v412, %v411
      %v435 = vpack.c.bf16 %v414, %v413
      %v436 = vpack.c.bf16 %v416, %v415
      %v437 = vpack.c.bf16 %v418, %v417
      %v438 = vpack.c.bf16 %v420, %v419
      %v439 = vpack.c.bf16 %v422, %v421
      %v440 = vpack.c.bf16 %v424, %v423
      %v441 = vld [vmem:[%s1] sm:$0xff]
      %v442 = vld [vmem:[%s1 + $0x8] sm:$0xff]
      %v443 = vld [vmem:[%s1 + $0x10] sm:$0xff]
      %v444 = vld [vmem:[%s1 + $0x18] sm:$0xff]
      %v445 = vld [vmem:[%s1 + $0x20] sm:$0xff]
      %v446 = vld [vmem:[%s1 + $0x28] sm:$0xff]
      %v447 = vld [vmem:[%s1 + $0x30] sm:$0xff]
      %v448 = vld [vmem:[%s1 + $0x38] sm:$0xff]
      %v449 = vld [vmem:[%s2] sm:$0xf]
      %v451 = vlaneseq
      %v452 = vshrl.u32 %v451, 7
      %v453 = vsub.s32 0, %v452
      %v454 = vrot.slane %v449, %v453
      %v455 = vlaneseq
      %v456 = vshrl.u32 %v455, 7
      %v457 = vsub.s32 1, %v456
      %v458 = vrot.slane %v449, %v457
      %v459 = vlaneseq
      %v460 = vshrl.u32 %v459, 7
      %v461 = vsub.s32 2, %v460
      %v462 = vrot.slane %v449, %v461
      %v463 = vlaneseq
      %v464 = vshrl.u32 %v463, 7
      %v465 = vsub.s32 3, %v464
      %v466 = vrot.slane %v449, %v465
      %v479 = vunpack.c.l.b16 %v441
      %v480 = vunpack.c.h.b16 %v441
      %v481 = vunpack.c.l.b16 %v442
      %v482 = vunpack.c.h.b16 %v442
      %v483 = vunpack.c.l.b16 %v443
      %v484 = vunpack.c.h.b16 %v443
      %v485 = vunpack.c.l.b16 %v444
      %v486 = vunpack.c.h.b16 %v444
      %v487 = vunpack.c.l.b16 %v445
      %v488 = vunpack.c.h.b16 %v445
      %v489 = vunpack.c.l.b16 %v446
      %v490 = vunpack.c.h.b16 %v446
      %v491 = vunpack.c.l.b16 %v447
      %v492 = vunpack.c.h.b16 %v447
      %v493 = vunpack.c.l.b16 %v448
      %v494 = vunpack.c.h.b16 %v448
      %v495 = vpack.c.b16 %v483, %v479
      %v496 = vpack.c.b16 %v484, %v480
      %v497 = vpack.c.b16 %v485, %v481
      %v498 = vpack.c.b16 %v486, %v482
      %v499 = vpack.c.b16 %v491, %v487
      %v500 = vpack.c.b16 %v492, %v488
      %v501 = vpack.c.b16 %v493, %v489
      %v502 = vpack.c.b16 %v494, %v490
      %vm511 = vcmask 261120
      %v513 = vsel %vm511, %v425, 0
      %v516 = vsel %vm511, %v426, 0
      %v519 = vsel %vm511, %v427, 0
      %v522 = vsel %vm511, %v428, 0
      %v525 = vsel %vm511, %v429, 0
      %v528 = vsel %vm511, %v430, 0
      %v531 = vsel %vm511, %v431, 0
      %v534 = vsel %vm511, %v432, 0
      %v537 = vsel %vm511, %v433, 0
      %v540 = vsel %vm511, %v434, 0
      %v543 = vsel %vm511, %v435, 0
      %v546 = vsel %vm511, %v436, 0
      %v549 = vsel %vm511, %v437, 0
      %v552 = vsel %vm511, %v438, 0
      %v555 = vsel %vm511, %v439, 0
      %v558 = vsel %vm511, %v440, 0
      %560 = vmatprep.subr.bf16.mxu0 0
      %561 = vmatpush1.bf16.msra.mxu0 0
      %562 = vmatprep.subr.bf16.mxu0 0
      %563 = vmatpush1.bf16.msra.mxu0 0
      %564 = vmatprep.subr.bf16.mxu0 0
      %565 = vmatpush1.bf16.msra.mxu0 0
      %566 = vmatprep.subr.bf16.mxu0 0
      %567 = vmatpush1.bf16.msra.mxu0 0
      %568 = vmatprep.subr.bf16.mxu0 0
      %569 = vmatpush1.bf16.msra.mxu0 0
      %570 = vmatprep.subr.bf16.mxu0 0
      %571 = vmatpush1.bf16.msra.mxu0 0
      %572 = vmatprep.subr.bf16.mxu0 %v500
      %573 = vmatpush1.bf16.msra.mxu0 %v499
      %574 = vmatprep.subr.bf16.mxu0 %v496
      %575 = vmatpush1.bf16.msra.mxu0 %v495
      %576 = vmatprep.subr.bf16.mxu0 0
      %577 = vmatpush2.bf16.msra.mxu0 0
      %578 = vmatprep.subr.bf16.mxu0 0
      %579 = vmatpush2.bf16.msra.mxu0 0
      %580 = vmatprep.subr.bf16.mxu0 0
      %581 = vmatpush2.bf16.msra.mxu0 0
      %582 = vmatprep.subr.bf16.mxu0 0
      %583 = vmatpush2.bf16.msra.mxu0 0
      %584 = vmatprep.subr.bf16.mxu0 0
      %585 = vmatpush2.bf16.msra.mxu0 0
      %586 = vmatprep.subr.bf16.mxu0 0
      %587 = vmatpush2.bf16.msra.mxu0 0
      %588 = vmatprep.subr.bf16.mxu0 0
      %589 = vmatpush2.bf16.msra.mxu0 0
      %590 = vmatprep.subr.bf16.mxu0 0
      %591 = vmatpush2.bf16.msra.mxu0 0
      %592 = vmatprep.mubr.bf16.mxu0 0
      %593 = vmatmul.mubr.bf16.gmra.mxu0 %v513
      %v594 = vpop.f32.mrf.mxu0
      %v595 = vadd.f32 %v454, %v594
      %v596 = vpop.f32.mrf.mxu0
      %v597 = vadd.f32 %v458, %v596
      %v598 = vpop.f32.mrf.mxu0
      %v599 = vadd.f32 %v454, %v598
      %v600 = vpop.f32.mrf.mxu0
      %v601 = vadd.f32 %v458, %v600
      %602 = vmatprep.mubr.bf16.mxu0 0
      %603 = vmatmul.mubr.bf16.gmra.mxu0 %v516
      %v604 = vpop.f32.mrf.mxu0
      %v605 = vadd.f32 %v454, %v604
      %v606 = vpop.f32.mrf.mxu0
      %v607 = vadd.f32 %v458, %v606
      %v608 = vpop.f32.mrf.mxu0
      %v609 = vadd.f32 %v454, %v608
      %v610 = vpop.f32.mrf.mxu0
      %v611 = vadd.f32 %v458, %v610
      %612 = vmatprep.mubr.bf16.mxu0 0
      %613 = vmatmul.mubr.bf16.gmra.mxu0 %v519
      %v614 = vpop.f32.mrf.mxu0
      %v615 = vadd.f32 %v454, %v614
      %v616 = vpop.f32.mrf.mxu0
      %v617 = vadd.f32 %v458, %v616
      %v618 = vpop.f32.mrf.mxu0
      %v619 = vadd.f32 %v454, %v618
      %v620 = vpop.f32.mrf.mxu0
      %v621 = vadd.f32 %v458, %v620
      %622 = vmatprep.mubr.bf16.mxu0 0
      %623 = vmatmul.mubr.bf16.gmra.mxu0 %v522
      %v624 = vpop.f32.mrf.mxu0
      %v625 = vadd.f32 %v454, %v624
      %v626 = vpop.f32.mrf.mxu0
      %v627 = vadd.f32 %v458, %v626
      %v628 = vpop.f32.mrf.mxu0
      %v629 = vadd.f32 %v454, %v628
      %v630 = vpop.f32.mrf.mxu0
      %v631 = vadd.f32 %v458, %v630
      %632 = vmatprep.mubr.bf16.mxu0 0
      %633 = vmatmul.mubr.bf16.gmra.mxu0 %v525
      %v634 = vpop.f32.mrf.mxu0
      %v635 = vadd.f32 %v454, %v634
      %v636 = vpop.f32.mrf.mxu0
      %v637 = vadd.f32 %v458, %v636
      %v638 = vpop.f32.mrf.mxu0
      %v639 = vadd.f32 %v454, %v638
      %v640 = vpop.f32.mrf.mxu0
      %v641 = vadd.f32 %v458, %v640
      %642 = vmatprep.mubr.bf16.mxu0 0
      %643 = vmatmul.mubr.bf16.gmra.mxu0 %v528
      %v644 = vpop.f32.mrf.mxu0
      %v645 = vadd.f32 %v454, %v644
      %v646 = vpop.f32.mrf.mxu0
      %v647 = vadd.f32 %v458, %v646
      %v648 = vpop.f32.mrf.mxu0
      %v649 = vadd.f32 %v454, %v648
      %v650 = vpop.f32.mrf.mxu0
      %v651 = vadd.f32 %v458, %v650
      %652 = vmatprep.mubr.bf16.mxu0 0
      %653 = vmatmul.mubr.bf16.gmra.mxu0 %v531
      %v654 = vpop.f32.mrf.mxu0
      %v655 = vadd.f32 %v454, %v654
      %v656 = vpop.f32.mrf.mxu0
      %v657 = vadd.f32 %v458, %v656
      %v658 = vpop.f32.mrf.mxu0
      %v659 = vadd.f32 %v454, %v658
      %v660 = vpop.f32.mrf.mxu0
      %v661 = vadd.f32 %v458, %v660
      %662 = vmatprep.mubr.bf16.mxu0 0
      %663 = vmatmul.mubr.bf16.gmra.mxu0 %v534
      %v664 = vpop.f32.mrf.mxu0
      %v665 = vadd.f32 %v454, %v664
      %v666 = vpop.f32.mrf.mxu0
      %v667 = vadd.f32 %v458, %v666
      %v668 = vpop.f32.mrf.mxu0
      %v669 = vadd.f32 %v454, %v668
      %v670 = vpop.f32.mrf.mxu0
      %v671 = vadd.f32 %v458, %v670
      %672 = vmatprep.mubr.bf16.mxu0 0
      %673 = vmatmul.mubr.bf16.gmra.mxu0 %v537
      %v674 = vpop.f32.mrf.mxu0
      %v675 = vadd.f32 %v454, %v674
      %v676 = vpop.f32.mrf.mxu0
      %v677 = vadd.f32 %v458, %v676
      %v678 = vpop.f32.mrf.mxu0
      %v679 = vadd.f32 %v454, %v678
      %v680 = vpop.f32.mrf.mxu0
      %v681 = vadd.f32 %v458, %v680
      %682 = vmatprep.mubr.bf16.mxu0 0
      %683 = vmatmul.mubr.bf16.gmra.mxu0 %v540
      %v684 = vpop.f32.mrf.mxu0
      %v685 = vadd.f32 %v454, %v684
      %v686 = vpop.f32.mrf.mxu0
      %v687 = vadd.f32 %v458, %v686
      %v688 = vpop.f32.mrf.mxu0
      %v689 = vadd.f32 %v454, %v688
      %v690 = vpop.f32.mrf.mxu0
      %v691 = vadd.f32 %v458, %v690
      %692 = vmatprep.mubr.bf16.mxu0 0
      %693 = vmatmul.mubr.bf16.gmra.mxu0 %v543
      %v694 = vpop.f32.mrf.mxu0
      %v695 = vadd.f32 %v454, %v694
      %v696 = vpop.f32.mrf.mxu0
      %v697 = vadd.f32 %v458, %v696
      %v698 = vpop.f32.mrf.mxu0
      %v699 = vadd.f32 %v454, %v698
      %v700 = vpop.f32.mrf.mxu0
      %v701 = vadd.f32 %v458, %v700
      %702 = vmatprep.mubr.bf16.mxu0 0
      %703 = vmatmul.mubr.bf16.gmra.mxu0 %v546
      %v704 = vpop.f32.mrf.mxu0
      %v705 = vadd.f32 %v454, %v704
      %v706 = vpop.f32.mrf.mxu0
      %v707 = vadd.f32 %v458, %v706
      %v708 = vpop.f32.mrf.mxu0
      %v709 = vadd.f32 %v454, %v708
      %v710 = vpop.f32.mrf.mxu0
      %v711 = vadd.f32 %v458, %v710
      %712 = vmatprep.mubr.bf16.mxu0 0
      %713 = vmatmul.mubr.bf16.gmra.mxu0 %v549
      %v714 = vpop.f32.mrf.mxu0
      %v715 = vadd.f32 %v454, %v714
      %v716 = vpop.f32.mrf.mxu0
      %v717 = vadd.f32 %v458, %v716
      %v718 = vpop.f32.mrf.mxu0
      %v719 = vadd.f32 %v454, %v718
      %v720 = vpop.f32.mrf.mxu0
      %v721 = vadd.f32 %v458, %v720
      %722 = vmatprep.mubr.bf16.mxu0 0
      %723 = vmatmul.mubr.bf16.gmra.mxu0 %v552
      %v724 = vpop.f32.mrf.mxu0
      %v725 = vadd.f32 %v454, %v724
      %v726 = vpop.f32.mrf.mxu0
      %v727 = vadd.f32 %v458, %v726
      %v728 = vpop.f32.mrf.mxu0
      %v729 = vadd.f32 %v454, %v728
      %v730 = vpop.f32.mrf.mxu0
      %v731 = vadd.f32 %v458, %v730
      %732 = vmatprep.mubr.bf16.mxu0 0
      %733 = vmatmul.mubr.bf16.gmra.mxu0 %v555
      %v734 = vpop.f32.mrf.mxu0
      %v735 = vadd.f32 %v454, %v734
      %v736 = vpop.f32.mrf.mxu0
      %v737 = vadd.f32 %v458, %v736
      %v738 = vpop.f32.mrf.mxu0
      %v739 = vadd.f32 %v454, %v738
      %v740 = vpop.f32.mrf.mxu0
      %v741 = vadd.f32 %v458, %v740
      %742 = vmatprep.mubr.bf16.mxu0 0
      %743 = vmatmul.mubr.bf16.gmra.mxu0 %v558
      %v744 = vpop.f32.mrf.mxu0
      %v745 = vadd.f32 %v454, %v744
      %v746 = vpop.f32.mrf.mxu0
      %v747 = vadd.f32 %v458, %v746
      %v748 = vpop.f32.mrf.mxu0
      %v749 = vadd.f32 %v454, %v748
      %v750 = vpop.f32.mrf.mxu0
      %v751 = vadd.f32 %v458, %v750
      %752 = vdwg.mxu0
      %753 = vmatprep.subr.bf16.mxu0 0
      %754 = vmatpush1.bf16.msra.mxu0 0
      %755 = vmatprep.subr.bf16.mxu0 0
      %756 = vmatpush1.bf16.msra.mxu0 0
      %757 = vmatprep.subr.bf16.mxu0 0
      %758 = vmatpush1.bf16.msra.mxu0 0
      %759 = vmatprep.subr.bf16.mxu0 0
      %760 = vmatpush1.bf16.msra.mxu0 0
      %761 = vmatprep.subr.bf16.mxu0 0
      %762 = vmatpush1.bf16.msra.mxu0 0
      %763 = vmatprep.subr.bf16.mxu0 0
      %764 = vmatpush1.bf16.msra.mxu0 0
      %765 = vmatprep.subr.bf16.mxu0 %v502
      %766 = vmatpush1.bf16.msra.mxu0 %v501
      %767 = vmatprep.subr.bf16.mxu0 %v498
      %768 = vmatpush1.bf16.msra.mxu0 %v497
      %769 = vmatprep.subr.bf16.mxu0 0
      %770 = vmatpush2.bf16.msra.mxu0 0
      %771 = vmatprep.subr.bf16.mxu0 0
      %772 = vmatpush2.bf16.msra.mxu0 0
      %773 = vmatprep.subr.bf16.mxu0 0
      %774 = vmatpush2.bf16.msra.mxu0 0
      %775 = vmatprep.subr.bf16.mxu0 0
      %776 = vmatpush2.bf16.msra.mxu0 0
      %777 = vmatprep.subr.bf16.mxu0 0
      %778 = vmatpush2.bf16.msra.mxu0 0
      %779 = vmatprep.subr.bf16.mxu0 0
      %780 = vmatpush2.bf16.msra.mxu0 0
      %781 = vmatprep.subr.bf16.mxu0 0
      %782 = vmatpush2.bf16.msra.mxu0 0
      %783 = vmatprep.subr.bf16.mxu0 0
      %784 = vmatpush2.bf16.msra.mxu0 0
      %785 = vmatprep.mubr.bf16.mxu0 0
      %786 = vmatmul.mubr.bf16.gmra.mxu0 %v513
      %v787 = vpop.f32.mrf.mxu0
      %v788 = vadd.f32 %v462, %v787
      %v789 = vpop.f32.mrf.mxu0
      %v790 = vadd.f32 %v466, %v789
      %v791 = vpop.f32.mrf.mxu0
      %v792 = vadd.f32 %v462, %v791
      %v793 = vpop.f32.mrf.mxu0
      %v794 = vadd.f32 %v466, %v793
      %795 = vmatprep.mubr.bf16.mxu0 0
      %796 = vmatmul.mubr.bf16.gmra.mxu0 %v516
      %v797 = vpop.f32.mrf.mxu0
      %v798 = vadd.f32 %v462, %v797
      %v799 = vpop.f32.mrf.mxu0
      %v800 = vadd.f32 %v466, %v799
      %v801 = vpop.f32.mrf.mxu0
      %v802 = vadd.f32 %v462, %v801
      %v803 = vpop.f32.mrf.mxu0
      %v804 = vadd.f32 %v466, %v803
      %805 = vmatprep.mubr.bf16.mxu0 0
      %806 = vmatmul.mubr.bf16.gmra.mxu0 %v519
      %v807 = vpop.f32.mrf.mxu0
      %v808 = vadd.f32 %v462, %v807
      %v809 = vpop.f32.mrf.mxu0
      %v810 = vadd.f32 %v466, %v809
      %v811 = vpop.f32.mrf.mxu0
      %v812 = vadd.f32 %v462, %v811
      %v813 = vpop.f32.mrf.mxu0
      %v814 = vadd.f32 %v466, %v813
      %815 = vmatprep.mubr.bf16.mxu0 0
      %816 = vmatmul.mubr.bf16.gmra.mxu0 %v522
      %v817 = vpop.f32.mrf.mxu0
      %v818 = vadd.f32 %v462, %v817
      %v819 = vpop.f32.mrf.mxu0
      %v820 = vadd.f32 %v466, %v819
      %v821 = vpop.f32.mrf.mxu0
      %v822 = vadd.f32 %v462, %v821
      %v823 = vpop.f32.mrf.mxu0
      %v824 = vadd.f32 %v466, %v823
      %825 = vmatprep.mubr.bf16.mxu0 0
      %826 = vmatmul.mubr.bf16.gmra.mxu0 %v525
      %v827 = vpop.f32.mrf.mxu0
      %v828 = vadd.f32 %v462, %v827
      %v829 = vpop.f32.mrf.mxu0
      %v830 = vadd.f32 %v466, %v829
      %v831 = vpop.f32.mrf.mxu0
      %v832 = vadd.f32 %v462, %v831
      %v833 = vpop.f32.mrf.mxu0
      %v834 = vadd.f32 %v466, %v833
      %835 = vmatprep.mubr.bf16.mxu0 0
      %836 = vmatmul.mubr.bf16.gmra.mxu0 %v528
      %v837 = vpop.f32.mrf.mxu0
      %v838 = vadd.f32 %v462, %v837
      %v839 = vpop.f32.mrf.mxu0
      %v840 = vadd.f32 %v466, %v839
      %v841 = vpop.f32.mrf.mxu0
      %v842 = vadd.f32 %v462, %v841
      %v843 = vpop.f32.mrf.mxu0
      %v844 = vadd.f32 %v466, %v843
      %845 = vmatprep.mubr.bf16.mxu0 0
      %846 = vmatmul.mubr.bf16.gmra.mxu0 %v531
      %v847 = vpop.f32.mrf.mxu0
      %v848 = vadd.f32 %v462, %v847
      %v849 = vpop.f32.mrf.mxu0
      %v850 = vadd.f32 %v466, %v849
      %v851 = vpop.f32.mrf.mxu0
      %v852 = vadd.f32 %v462, %v851
      %v853 = vpop.f32.mrf.mxu0
      %v854 = vadd.f32 %v466, %v853
      %855 = vmatprep.mubr.bf16.mxu0 0
      %856 = vmatmul.mubr.bf16.gmra.mxu0 %v534
      %v857 = vpop.f32.mrf.mxu0
      %v858 = vadd.f32 %v462, %v857
      %v859 = vpop.f32.mrf.mxu0
      %v860 = vadd.f32 %v466, %v859
      %v861 = vpop.f32.mrf.mxu0
      %v862 = vadd.f32 %v462, %v861
      %v863 = vpop.f32.mrf.mxu0
      %v864 = vadd.f32 %v466, %v863
      %865 = vmatprep.mubr.bf16.mxu0 0
      %866 = vmatmul.mubr.bf16.gmra.mxu0 %v537
      %v867 = vpop.f32.mrf.mxu0
      %v868 = vadd.f32 %v462, %v867
      %v869 = vpop.f32.mrf.mxu0
      %v870 = vadd.f32 %v466, %v869
      %v871 = vpop.f32.mrf.mxu0
      %v872 = vadd.f32 %v462, %v871
      %v873 = vpop.f32.mrf.mxu0
      %v874 = vadd.f32 %v466, %v873
      %875 = vmatprep.mubr.bf16.mxu0 0
      %876 = vmatmul.mubr.bf16.gmra.mxu0 %v540
      %v877 = vpop.f32.mrf.mxu0
      %v878 = vadd.f32 %v462, %v877
      %v879 = vpop.f32.mrf.mxu0
      %v880 = vadd.f32 %v466, %v879
      %v881 = vpop.f32.mrf.mxu0
      %v882 = vadd.f32 %v462, %v881
      %v883 = vpop.f32.mrf.mxu0
      %v884 = vadd.f32 %v466, %v883
      %885 = vmatprep.mubr.bf16.mxu0 0
      %886 = vmatmul.mubr.bf16.gmra.mxu0 %v543
      %v887 = vpop.f32.mrf.mxu0
      %v888 = vadd.f32 %v462, %v887
      %v889 = vpop.f32.mrf.mxu0
      %v890 = vadd.f32 %v466, %v889
      %v891 = vpop.f32.mrf.mxu0
      %v892 = vadd.f32 %v462, %v891
      %v893 = vpop.f32.mrf.mxu0
      %v894 = vadd.f32 %v466, %v893
      %895 = vmatprep.mubr.bf16.mxu0 0
      %896 = vmatmul.mubr.bf16.gmra.mxu0 %v546
      %v897 = vpop.f32.mrf.mxu0
      %v898 = vadd.f32 %v462, %v897
      %v899 = vpop.f32.mrf.mxu0
      %v900 = vadd.f32 %v466, %v899
      %v901 = vpop.f32.mrf.mxu0
      %v902 = vadd.f32 %v462, %v901
      %v903 = vpop.f32.mrf.mxu0
      %v904 = vadd.f32 %v466, %v903
      %905 = vmatprep.mubr.bf16.mxu0 0
      %906 = vmatmul.mubr.bf16.gmra.mxu0 %v549
      %v907 = vpop.f32.mrf.mxu0
      %v908 = vadd.f32 %v462, %v907
      %v909 = vpop.f32.mrf.mxu0
      %v910 = vadd.f32 %v466, %v909
      %v911 = vpop.f32.mrf.mxu0
      %v912 = vadd.f32 %v462, %v911
      %v913 = vpop.f32.mrf.mxu0
      %v914 = vadd.f32 %v466, %v913
      %915 = vmatprep.mubr.bf16.mxu0 0
      %916 = vmatmul.mubr.bf16.gmra.mxu0 %v552
      %v917 = vpop.f32.mrf.mxu0
      %v918 = vadd.f32 %v462, %v917
      %v919 = vpop.f32.mrf.mxu0
      %v920 = vadd.f32 %v466, %v919
      %v921 = vpop.f32.mrf.mxu0
      %v922 = vadd.f32 %v462, %v921
      %v923 = vpop.f32.mrf.mxu0
      %v924 = vadd.f32 %v466, %v923
      %925 = vmatprep.mubr.bf16.mxu0 0
      %926 = vmatmul.mubr.bf16.gmra.mxu0 %v555
      %v927 = vpop.f32.mrf.mxu0
      %v928 = vadd.f32 %v462, %v927
      %v929 = vpop.f32.mrf.mxu0
      %v930 = vadd.f32 %v466, %v929
      %v931 = vpop.f32.mrf.mxu0
      %v932 = vadd.f32 %v462, %v931
      %v933 = vpop.f32.mrf.mxu0
      %v934 = vadd.f32 %v466, %v933
      %935 = vmatprep.mubr.bf16.mxu0 0
      %936 = vmatmul.mubr.bf16.gmra.mxu0 %v558
      %v937 = vpop.f32.mrf.mxu0
      %v938 = vadd.f32 %v462, %v937
      %v939 = vpop.f32.mrf.mxu0
      %v940 = vadd.f32 %v466, %v939
      %v941 = vpop.f32.mrf.mxu0
      %v942 = vadd.f32 %v462, %v941
      %v943 = vpop.f32.mrf.mxu0
      %v944 = vadd.f32 %v466, %v943
      %945 = vdwg.mxu0
      %v946 = vmax.f32 %v595, 0.0
      %v947 = vmax.f32 %v597, 0.0
      %v948 = vmax.f32 %v788, 0.0
      %v949 = vmax.f32 %v790, 0.0
      %v950 = vmax.f32 %v599, 0.0
      %v951 = vmax.f32 %v601, 0.0
      %v952 = vmax.f32 %v792, 0.0
      %v953 = vmax.f32 %v794, 0.0
      %v954 = vmax.f32 %v605, 0.0
      %v955 = vmax.f32 %v607, 0.0
      %v956 = vmax.f32 %v798, 0.0
      %v957 = vmax.f32 %v800, 0.0
      %v958 = vmax.f32 %v609, 0.0
      %v959 = vmax.f32 %v611, 0.0
      %v960 = vmax.f32 %v802, 0.0
      %v961 = vmax.f32 %v804, 0.0
      %v962 = vmax.f32 %v615, 0.0
      %v963 = vmax.f32 %v617, 0.0
      %v964 = vmax.f32 %v808, 0.0
      %v965 = vmax.f32 %v810, 0.0
      %v966 = vmax.f32 %v619, 0.0
      %v967 = vmax.f32 %v621, 0.0
      %v968 = vmax.f32 %v812, 0.0
      %v969 = vmax.f32 %v814, 0.0
      %v970 = vmax.f32 %v625, 0.0
      %v971 = vmax.f32 %v627, 0.0
      %v972 = vmax.f32 %v818, 0.0
      %v973 = vmax.f32 %v820, 0.0
      %v974 = vmax.f32 %v629, 0.0
      %v975 = vmax.f32 %v631, 0.0
      %v976 = vmax.f32 %v822, 0.0
      %v977 = vmax.f32 %v824, 0.0
      %v978 = vmax.f32 %v635, 0.0
      %v979 = vmax.f32 %v637, 0.0
      %v980 = vmax.f32 %v828, 0.0
      %v981 = vmax.f32 %v830, 0.0
      %v982 = vmax.f32 %v639, 0.0
      %v983 = vmax.f32 %v641, 0.0
      %v984 = vmax.f32 %v832, 0.0
      %v985 = vmax.f32 %v834, 0.0
      %v986 = vmax.f32 %v645, 0.0
      %v987 = vmax.f32 %v647, 0.0
      %v988 = vmax.f32 %v838, 0.0
      %v989 = vmax.f32 %v840, 0.0
      %v990 = vmax.f32 %v649, 0.0
      %v991 = vmax.f32 %v651, 0.0
      %v992 = vmax.f32 %v842, 0.0
      %v993 = vmax.f32 %v844, 0.0
      %v994 = vmax.f32 %v655, 0.0
      %v995 = vmax.f32 %v657, 0.0
      %v996 = vmax.f32 %v848, 0.0
      %v997 = vmax.f32 %v850, 0.0
      %v998 = vmax.f32 %v659, 0.0
      %v999 = vmax.f32 %v661, 0.0
      %v1000 = vmax.f32 %v852, 0.0
      %v1001 = vmax.f32 %v854, 0.0
      %v1002 = vmax.f32 %v665, 0.0
      %v1003 = vmax.f32 %v667, 0.0
      %v1004 = vmax.f32 %v858, 0.0
      %v1005 = vmax.f32 %v860, 0.0
      %v1006 = vmax.f32 %v669, 0.0
      %v1007 = vmax.f32 %v671, 0.0
      %v1008 = vmax.f32 %v862, 0.0
      %v1009 = vmax.f32 %v864, 0.0
      %v1010 = vmax.f32 %v675, 0.0
      %v1011 = vmax.f32 %v677, 0.0
      %v1012 = vmax.f32 %v868, 0.0
      %v1013 = vmax.f32 %v870, 0.0
      %v1014 = vmax.f32 %v679, 0.0
      %v1015 = vmax.f32 %v681, 0.0
      %v1016 = vmax.f32 %v872, 0.0
      %v1017 = vmax.f32 %v874, 0.0
      %v1018 = vmax.f32 %v685, 0.0
      %v1019 = vmax.f32 %v687, 0.0
      %v1020 = vmax.f32 %v878, 0.0
      %v1021 = vmax.f32 %v880, 0.0
      %v1022 = vmax.f32 %v689, 0.0
      %v1023 = vmax.f32 %v691, 0.0
      %v1024 = vmax.f32 %v882, 0.0
      %v1025 = vmax.f32 %v884, 0.0
      %v1026 = vmax.f32 %v695, 0.0
      %v1027 = vmax.f32 %v697, 0.0
      %v1028 = vmax.f32 %v888, 0.0
      %v1029 = vmax.f32 %v890, 0.0
      %v1030 = vmax.f32 %v699, 0.0
      %v1031 = vmax.f32 %v701, 0.0
      %v1032 = vmax.f32 %v892, 0.0
      %v1033 = vmax.f32 %v894, 0.0
      %v1034 = vmax.f32 %v705, 0.0
      %v1035 = vmax.f32 %v707, 0.0
      %v1036 = vmax.f32 %v898, 0.0
      %v1037 = vmax.f32 %v900, 0.0
      %v1038 = vmax.f32 %v709, 0.0
      %v1039 = vmax.f32 %v711, 0.0
      %v1040 = vmax.f32 %v902, 0.0
      %v1041 = vmax.f32 %v904, 0.0
      %v1042 = vmax.f32 %v715, 0.0
      %v1043 = vmax.f32 %v717, 0.0
      %v1044 = vmax.f32 %v908, 0.0
      %v1045 = vmax.f32 %v910, 0.0
      %v1046 = vmax.f32 %v719, 0.0
      %v1047 = vmax.f32 %v721, 0.0
      %v1048 = vmax.f32 %v912, 0.0
      %v1049 = vmax.f32 %v914, 0.0
      %v1050 = vmax.f32 %v725, 0.0
      %v1051 = vmax.f32 %v727, 0.0
      %v1052 = vmax.f32 %v918, 0.0
      %v1053 = vmax.f32 %v920, 0.0
      %v1054 = vmax.f32 %v729, 0.0
      %v1055 = vmax.f32 %v731, 0.0
      %v1056 = vmax.f32 %v922, 0.0
      %v1057 = vmax.f32 %v924, 0.0
      %v1058 = vmax.f32 %v735, 0.0
      %v1059 = vmax.f32 %v737, 0.0
      %v1060 = vmax.f32 %v928, 0.0
      %v1061 = vmax.f32 %v930, 0.0
      %v1062 = vmax.f32 %v739, 0.0
      %v1063 = vmax.f32 %v741, 0.0
      %v1064 = vmax.f32 %v932, 0.0
      %v1065 = vmax.f32 %v934, 0.0
      %v1066 = vmax.f32 %v745, 0.0
      %v1067 = vmax.f32 %v747, 0.0
      %v1068 = vmax.f32 %v938, 0.0
      %v1069 = vmax.f32 %v940, 0.0
      %v1070 = vmax.f32 %v749, 0.0
      %v1071 = vmax.f32 %v751, 0.0
      %v1072 = vmax.f32 %v942, 0.0
      %v1073 = vmax.f32 %v944, 0.0
      %v1074 = vpack.c.bf16 %v950, %v946
      %v1075 = vpack.c.bf16 %v951, %v947
      %v1076 = vpack.c.bf16 %v952, %v948
      %v1077 = vpack.c.bf16 %v953, %v949
      %v1078 = vpack.c.bf16 %v958, %v954
      %v1079 = vpack.c.bf16 %v959, %v955
      %v1080 = vpack.c.bf16 %v960, %v956
      %v1081 = vpack.c.bf16 %v961, %v957
      %v1082 = vpack.c.bf16 %v966, %v962
      %v1083 = vpack.c.bf16 %v967, %v963
      %v1084 = vpack.c.bf16 %v968, %v964
      %v1085 = vpack.c.bf16 %v969, %v965
      %v1086 = vpack.c.bf16 %v974, %v970
      %v1087 = vpack.c.bf16 %v975, %v971
      %v1088 = vpack.c.bf16 %v976, %v972
      %v1089 = vpack.c.bf16 %v977, %v973
      %v1090 = vpack.c.bf16 %v982, %v978
      %v1091 = vpack.c.bf16 %v983, %v979
      %v1092 = vpack.c.bf16 %v984, %v980
      %v1093 = vpack.c.bf16 %v985, %v981
      %v1094 = vpack.c.bf16 %v990, %v986
      %v1095 = vpack.c.bf16 %v991, %v987
      %v1096 = vpack.c.bf16 %v992, %v988
      %v1097 = vpack.c.bf16 %v993, %v989
      %v1098 = vpack.c.bf16 %v998, %v994
      %v1099 = vpack.c.bf16 %v999, %v995
      %v1100 = vpack.c.bf16 %v1000, %v996
      %v1101 = vpack.c.bf16 %v1001, %v997
      %v1102 = vpack.c.bf16 %v1006, %v1002
      %v1103 = vpack.c.bf16 %v1007, %v1003
      %v1104 = vpack.c.bf16 %v1008, %v1004
      %v1105 = vpack.c.bf16 %v1009, %v1005
      %v1106 = vpack.c.bf16 %v1014, %v1010
      %v1107 = vpack.c.bf16 %v1015, %v1011
      %v1108 = vpack.c.bf16 %v1016, %v1012
      %v1109 = vpack.c.bf16 %v1017, %v1013
      %v1110 = vpack.c.bf16 %v1022, %v1018
      %v1111 = vpack.c.bf16 %v1023, %v1019
      %v1112 = vpack.c.bf16 %v1024, %v1020
      %v1113 = vpack.c.bf16 %v1025, %v1021
      %v1114 = vpack.c.bf16 %v1030, %v1026
      %v1115 = vpack.c.bf16 %v1031, %v1027
      %v1116 = vpack.c.bf16 %v1032, %v1028
      %v1117 = vpack.c.bf16 %v1033, %v1029
      %v1118 = vpack.c.bf16 %v1038, %v1034
      %v1119 = vpack.c.bf16 %v1039, %v1035
      %v1120 = vpack.c.bf16 %v1040, %v1036
      %v1121 = vpack.c.bf16 %v1041, %v1037
      %v1122 = vpack.c.bf16 %v1046, %v1042
      %v1123 = vpack.c.bf16 %v1047, %v1043
      %v1124 = vpack.c.bf16 %v1048, %v1044
      %v1125 = vpack.c.bf16 %v1049, %v1045
      %v1126 = vpack.c.bf16 %v1054, %v1050
      %v1127 = vpack.c.bf16 %v1055, %v1051
      %v1128 = vpack.c.bf16 %v1056, %v1052
      %v1129 = vpack.c.bf16 %v1057, %v1053
      %v1130 = vpack.c.bf16 %v1062, %v1058
      %v1131 = vpack.c.bf16 %v1063, %v1059
      %v1132 = vpack.c.bf16 %v1064, %v1060
      %v1133 = vpack.c.bf16 %v1065, %v1061
      %v1134 = vpack.c.bf16 %v1070, %v1066
      %v1135 = vpack.c.bf16 %v1071, %v1067
      %v1136 = vpack.c.bf16 %v1072, %v1068
      %v1137 = vpack.c.bf16 %v1073, %v1069
      %v1138 = vld [vmem:[%s3] sm:$0xff]
      %v1139 = vld [vmem:[%s3 + $0x8] sm:$0xff]
      %v1140 = vld [vmem:[%s3 + $0x10] sm:$0xff]
      %v1141 = vld [vmem:[%s3 + $0x18] sm:$0xff]
      %v1142 = vld [vmem:[%s3 + $0x20] sm:$0xff]
      %v1143 = vld [vmem:[%s3 + $0x28] sm:$0xff]
      %v1144 = vld [vmem:[%s3 + $0x30] sm:$0xff]
      %v1145 = vld [vmem:[%s3 + $0x38] sm:$0xff]
      %v1146 = vld [vmem:[%s3 + $0x40] sm:$0xff]
      %v1147 = vld [vmem:[%s3 + $0x48] sm:$0xff]
      %v1148 = vld [vmem:[%s3 + $0x50] sm:$0xff]
      %v1149 = vld [vmem:[%s3 + $0x58] sm:$0xff]
      %v1150 = vld [vmem:[%s3 + $0x60] sm:$0xff]
      %v1151 = vld [vmem:[%s3 + $0x68] sm:$0xff]
      %v1152 = vld [vmem:[%s3 + $0x70] sm:$0xff]
      %v1153 = vld [vmem:[%s3 + $0x78] sm:$0xff]
      %v1154 = vld [vmem:[%s3 + $0x80] sm:$0xff]
      %v1155 = vld [vmem:[%s3 + $0x88] sm:$0xff]
      %v1156 = vld [vmem:[%s3 + $0x90] sm:$0xff]
      %v1157 = vld [vmem:[%s3 + $0x98] sm:$0xff]
      %v1158 = vld [vmem:[%s3 + $0xa0] sm:$0xff]
      %v1159 = vld [vmem:[%s3 + $0xa8] sm:$0xff]
      %v1160 = vld [vmem:[%s3 + $0xb0] sm:$0xff]
      %v1161 = vld [vmem:[%s3 + $0xb8] sm:$0xff]
      %v1162 = vld [vmem:[%s3 + $0xc0] sm:$0xff]
      %v1163 = vld [vmem:[%s3 + $0xc8] sm:$0xff]
      %v1164 = vld [vmem:[%s3 + $0xd0] sm:$0xff]
      %v1165 = vld [vmem:[%s3 + $0xd8] sm:$0xff]
      %v1166 = vld [vmem:[%s3 + $0xe0] sm:$0xff]
      %v1167 = vld [vmem:[%s3 + $0xe8] sm:$0xff]
      %v1168 = vld [vmem:[%s3 + $0xf0] sm:$0xff]
      %v1169 = vld [vmem:[%s3 + $0xf8] sm:$0xff]
      %v1170 = vld [vmem:[%s3 + $0x100] sm:$0xff]
      %v1171 = vld [vmem:[%s3 + $0x108] sm:$0xff]
      %v1172 = vld [vmem:[%s3 + $0x110] sm:$0xff]
      %v1173 = vld [vmem:[%s3 + $0x118] sm:$0xff]
      %v1174 = vld [vmem:[%s3 + $0x120] sm:$0xff]
      %v1175 = vld [vmem:[%s3 + $0x128] sm:$0xff]
      %v1176 = vld [vmem:[%s3 + $0x130] sm:$0xff]
      %v1177 = vld [vmem:[%s3 + $0x138] sm:$0xff]
      %v1178 = vld [vmem:[%s3 + $0x140] sm:$0xff]
      %v1179 = vld [vmem:[%s3 + $0x148] sm:$0xff]
      %v1180 = vld [vmem:[%s3 + $0x150] sm:$0xff]
      %v1181 = vld [vmem:[%s3 + $0x158] sm:$0xff]
      %v1182 = vld [vmem:[%s3 + $0x160] sm:$0xff]
      %v1183 = vld [vmem:[%s3 + $0x168] sm:$0xff]
      %v1184 = vld [vmem:[%s3 + $0x170] sm:$0xff]
      %v1185 = vld [vmem:[%s3 + $0x178] sm:$0xff]
      %v1186 = vld [vmem:[%s3 + $0x180] sm:$0xff]
      %v1187 = vld [vmem:[%s3 + $0x188] sm:$0xff]
      %v1188 = vld [vmem:[%s3 + $0x190] sm:$0xff]
      %v1189 = vld [vmem:[%s3 + $0x198] sm:$0xff]
      %v1190 = vld [vmem:[%s3 + $0x1a0] sm:$0xff]
      %v1191 = vld [vmem:[%s3 + $0x1a8] sm:$0xff]
      %v1192 = vld [vmem:[%s3 + $0x1b0] sm:$0xff]
      %v1193 = vld [vmem:[%s3 + $0x1b8] sm:$0xff]
      %v1194 = vld [vmem:[%s3 + $0x1c0] sm:$0xff]
      %v1195 = vld [vmem:[%s3 + $0x1c8] sm:$0xff]
      %v1196 = vld [vmem:[%s3 + $0x1d0] sm:$0xff]
      %v1197 = vld [vmem:[%s3 + $0x1d8] sm:$0xff]
      %v1198 = vld [vmem:[%s3 + $0x1e0] sm:$0xff]
      %v1199 = vld [vmem:[%s3 + $0x1e8] sm:$0xff]
      %v1200 = vld [vmem:[%s3 + $0x1f0] sm:$0xff]
      %v1201 = vld [vmem:[%s3 + $0x1f8] sm:$0xff]
      %v1202 = vld [vmem:[%s4] sm:$0x3]
      %v1204 = vlaneseq
      %v1205 = vshrl.u32 %v1204, 7
      %v1206 = vsub.s32 0, %v1205
      %v1207 = vrot.slane %v1202, %v1206
      %v1208 = vlaneseq
      %v1209 = vshrl.u32 %v1208, 7
      %v1210 = vsub.s32 1, %v1209
      %v1211 = vrot.slane %v1202, %v1210
      %v1278 = vunpack.c.l.b16 %v1138
      %v1279 = vunpack.c.h.b16 %v1138
      %v1280 = vunpack.c.l.b16 %v1139
      %v1281 = vunpack.c.h.b16 %v1139
      %v1282 = vunpack.c.l.b16 %v1140
      %v1283 = vunpack.c.h.b16 %v1140
      %v1284 = vunpack.c.l.b16 %v1141
      %v1285 = vunpack.c.h.b16 %v1141
      %v1286 = vunpack.c.l.b16 %v1142
      %v1287 = vunpack.c.h.b16 %v1142
      %v1288 = vunpack.c.l.b16 %v1143
      %v1289 = vunpack.c.h.b16 %v1143
      %v1290 = vunpack.c.l.b16 %v1144
      %v1291 = vunpack.c.h.b16 %v1144
      %v1292 = vunpack.c.l.b16 %v1145
      %v1293 = vunpack.c.h.b16 %v1145
      %v1294 = vunpack.c.l.b16 %v1146
      %v1295 = vunpack.c.h.b16 %v1146
      %v1296 = vunpack.c.l.b16 %v1147
      %v1297 = vunpack.c.h.b16 %v1147
      %v1298 = vunpack.c.l.b16 %v1148
      %v1299 = vunpack.c.h.b16 %v1148
      %v1300 = vunpack.c.l.b16 %v1149
      %v1301 = vunpack.c.h.b16 %v1149
      %v1302 = vunpack.c.l.b16 %v1150
      %v1303 = vunpack.c.h.b16 %v1150
      %v1304 = vunpack.c.l.b16 %v1151
      %v1305 = vunpack.c.h.b16 %v1151
      %v1306 = vunpack.c.l.b16 %v1152
      %v1307 = vunpack.c.h.b16 %v1152
      %v1308 = vunpack.c.l.b16 %v1153
      %v1309 = vunpack.c.h.b16 %v1153
      %v1310 = vunpack.c.l.b16 %v1154
      %v1311 = vunpack.c.h.b16 %v1154
      %v1312 = vunpack.c.l.b16 %v1155
      %v1313 = vunpack.c.h.b16 %v1155
      %v1314 = vunpack.c.l.b16 %v1156
      %v1315 = vunpack.c.h.b16 %v1156
      %v1316 = vunpack.c.l.b16 %v1157
      %v1317 = vunpack.c.h.b16 %v1157
      %v1318 = vunpack.c.l.b16 %v1158
      %v1319 = vunpack.c.h.b16 %v1158
      %v1320 = vunpack.c.l.b16 %v1159
      %v1321 = vunpack.c.h.b16 %v1159
      %v1322 = vunpack.c.l.b16 %v1160
      %v1323 = vunpack.c.h.b16 %v1160
      %v1324 = vunpack.c.l.b16 %v1161
      %v1325 = vunpack.c.h.b16 %v1161
      %v1326 = vunpack.c.l.b16 %v1162
      %v1327 = vunpack.c.h.b16 %v1162
      %v1328 = vunpack.c.l.b16 %v1163
      %v1329 = vunpack.c.h.b16 %v1163
      %v1330 = vunpack.c.l.b16 %v1164
      %v1331 = vunpack.c.h.b16 %v1164
      %v1332 = vunpack.c.l.b16 %v1165
      %v1333 = vunpack.c.h.b16 %v1165
      %v1334 = vunpack.c.l.b16 %v1166
      %v1335 = vunpack.c.h.b16 %v1166
      %v1336 = vunpack.c.l.b16 %v1167
      %v1337 = vunpack.c.h.b16 %v1167
      %v1338 = vunpack.c.l.b16 %v1168
      %v1339 = vunpack.c.h.b16 %v1168
      %v1340 = vunpack.c.l.b16 %v1169
      %v1341 = vunpack.c.h.b16 %v1169
      %v1342 = vunpack.c.l.b16 %v1170
      %v1343 = vunpack.c.h.b16 %v1170
      %v1344 = vunpack.c.l.b16 %v1171
      %v1345 = vunpack.c.h.b16 %v1171
      %v1346 = vunpack.c.l.b16 %v1172
      %v1347 = vunpack.c.h.b16 %v1172
      %v1348 = vunpack.c.l.b16 %v1173
      %v1349 = vunpack.c.h.b16 %v1173
      %v1350 = vunpack.c.l.b16 %v1174
      %v1351 = vunpack.c.h.b16 %v1174
      %v1352 = vunpack.c.l.b16 %v1175
      %v1353 = vunpack.c.h.b16 %v1175
      %v1354 = vunpack.c.l.b16 %v1176
      %v1355 = vunpack.c.h.b16 %v1176
      %v1356 = vunpack.c.l.b16 %v1177
      %v1357 = vunpack.c.h.b16 %v1177
      %v1358 = vunpack.c.l.b16 %v1178
      %v1359 = vunpack.c.h.b16 %v1178
      %v1360 = vunpack.c.l.b16 %v1179
      %v1361 = vunpack.c.h.b16 %v1179
      %v1362 = vunpack.c.l.b16 %v1180
      %v1363 = vunpack.c.h.b16 %v1180
      %v1364 = vunpack.c.l.b16 %v1181
      %v1365 = vunpack.c.h.b16 %v1181
      %v1366 = vunpack.c.l.b16 %v1182
      %v1367 = vunpack.c.h.b16 %v1182
      %v1368 = vunpack.c.l.b16 %v1183
      %v1369 = vunpack.c.h.b16 %v1183
      %v1370 = vunpack.c.l.b16 %v1184
      %v1371 = vunpack.c.h.b16 %v1184
      %v1372 = vunpack.c.l.b16 %v1185
      %v1373 = vunpack.c.h.b16 %v1185
      %v1374 = vunpack.c.l.b16 %v1186
      %v1375 = vunpack.c.h.b16 %v1186
      %v1376 = vunpack.c.l.b16 %v1187
      %v1377 = vunpack.c.h.b16 %v1187
      %v1378 = vunpack.c.l.b16 %v1188
      %v1379 = vunpack.c.h.b16 %v1188
      %v1380 = vunpack.c.l.b16 %v1189
      %v1381 = vunpack.c.h.b16 %v1189
      %v1382 = vunpack.c.l.b16 %v1190
      %v1383 = vunpack.c.h.b16 %v1190
      %v1384 = vunpack.c.l.b16 %v1191
      %v1385 = vunpack.c.h.b16 %v1191
      %v1386 = vunpack.c.l.b16 %v1192
      %v1387 = vunpack.c.h.b16 %v1192
      %v1388 = vunpack.c.l.b16 %v1193
      %v1389 = vunpack.c.h.b16 %v1193
      %v1390 = vunpack.c.l.b16 %v1194
      %v1391 = vunpack.c.h.b16 %v1194
      %v1392 = vunpack.c.l.b16 %v1195
      %v1393 = vunpack.c.h.b16 %v1195
      %v1394 = vunpack.c.l.b16 %v1196
      %v1395 = vunpack.c.h.b16 %v1196
      %v1396 = vunpack.c.l.b16 %v1197
      %v1397 = vunpack.c.h.b16 %v1197
      %v1398 = vunpack.c.l.b16 %v1198
      %v1399 = vunpack.c.h.b16 %v1198
      %v1400 = vunpack.c.l.b16 %v1199
      %v1401 = vunpack.c.h.b16 %v1199
      %v1402 = vunpack.c.l.b16 %v1200
      %v1403 = vunpack.c.h.b16 %v1200
      %v1404 = vunpack.c.l.b16 %v1201
      %v1405 = vunpack.c.h.b16 %v1201
      %v1406 = vpack.c.b16 %v1280, %v1278
      %v1407 = vpack.c.b16 %v1281, %v1279
      %v1408 = vpack.c.b16 %v1284, %v1282
      %v1409 = vpack.c.b16 %v1285, %v1283
      %v1410 = vpack.c.b16 %v1288, %v1286
      %v1411 = vpack.c.b16 %v1289, %v1287
      %v1412 = vpack.c.b16 %v1292, %v1290
      %v1413 = vpack.c.b16 %v1293, %v1291
      %v1414 = vpack.c.b16 %v1296, %v1294
      %v1415 = vpack.c.b16 %v1297, %v1295
      %v1416 = vpack.c.b16 %v1300, %v1298
      %v1417 = vpack.c.b16 %v1301, %v1299
      %v1418 = vpack.c.b16 %v1304, %v1302
      %v1419 = vpack.c.b16 %v1305, %v1303
      %v1420 = vpack.c.b16 %v1308, %v1306
      %v1421 = vpack.c.b16 %v1309, %v1307
      %v1422 = vpack.c.b16 %v1312, %v1310
      %v1423 = vpack.c.b16 %v1313, %v1311
      %v1424 = vpack.c.b16 %v1316, %v1314
      %v1425 = vpack.c.b16 %v1317, %v1315
      %v1426 = vpack.c.b16 %v1320, %v1318
      %v1427 = vpack.c.b16 %v1321, %v1319
      %v1428 = vpack.c.b16 %v1324, %v1322
      %v1429 = vpack.c.b16 %v1325, %v1323
      %v1430 = vpack.c.b16 %v1328, %v1326
      %v1431 = vpack.c.b16 %v1329, %v1327
      %v1432 = vpack.c.b16 %v1332, %v1330
      %v1433 = vpack.c.b16 %v1333, %v1331
      %v1434 = vpack.c.b16 %v1336, %v1334
      %v1435 = vpack.c.b16 %v1337, %v1335
      %v1436 = vpack.c.b16 %v1340, %v1338
      %v1437 = vpack.c.b16 %v1341, %v1339
      %v1438 = vpack.c.b16 %v1344, %v1342
      %v1439 = vpack.c.b16 %v1345, %v1343
      %v1440 = vpack.c.b16 %v1348, %v1346
      %v1441 = vpack.c.b16 %v1349, %v1347
      %v1442 = vpack.c.b16 %v1352, %v1350
      %v1443 = vpack.c.b16 %v1353, %v1351
      %v1444 = vpack.c.b16 %v1356, %v1354
      %v1445 = vpack.c.b16 %v1357, %v1355
      %v1446 = vpack.c.b16 %v1360, %v1358
      %v1447 = vpack.c.b16 %v1361, %v1359
      %v1448 = vpack.c.b16 %v1364, %v1362
      %v1449 = vpack.c.b16 %v1365, %v1363
      %v1450 = vpack.c.b16 %v1368, %v1366
      %v1451 = vpack.c.b16 %v1369, %v1367
      %v1452 = vpack.c.b16 %v1372, %v1370
      %v1453 = vpack.c.b16 %v1373, %v1371
      %v1454 = vpack.c.b16 %v1376, %v1374
      %v1455 = vpack.c.b16 %v1377, %v1375
      %v1456 = vpack.c.b16 %v1380, %v1378
      %v1457 = vpack.c.b16 %v1381, %v1379
      %v1458 = vpack.c.b16 %v1384, %v1382
      %v1459 = vpack.c.b16 %v1385, %v1383
      %v1460 = vpack.c.b16 %v1388, %v1386
      %v1461 = vpack.c.b16 %v1389, %v1387
      %v1462 = vpack.c.b16 %v1392, %v1390
      %v1463 = vpack.c.b16 %v1393, %v1391
      %v1464 = vpack.c.b16 %v1396, %v1394
      %v1465 = vpack.c.b16 %v1397, %v1395
      %v1466 = vpack.c.b16 %v1400, %v1398
      %v1467 = vpack.c.b16 %v1401, %v1399
      %v1468 = vpack.c.b16 %v1404, %v1402
      %v1469 = vpack.c.b16 %v1405, %v1403
      %1534 = vmatprep.subr.bf16.mxu0 %v1421
      %1535 = vmatpush1.bf16.msra.mxu0 %v1420
      %1536 = vmatprep.subr.bf16.mxu0 %v1419
      %1537 = vmatpush1.bf16.msra.mxu0 %v1418
      %1538 = vmatprep.subr.bf16.mxu0 %v1417
      %1539 = vmatpush1.bf16.msra.mxu0 %v1416
      %1540 = vmatprep.subr.bf16.mxu0 %v1415
      %1541 = vmatpush1.bf16.msra.mxu0 %v1414
      %1542 = vmatprep.subr.bf16.mxu0 %v1413
      %1543 = vmatpush1.bf16.msra.mxu0 %v1412
      %1544 = vmatprep.subr.bf16.mxu0 %v1411
      %1545 = vmatpush1.bf16.msra.mxu0 %v1410
      %1546 = vmatprep.subr.bf16.mxu0 %v1409
      %1547 = vmatpush1.bf16.msra.mxu0 %v1408
      %1548 = vmatprep.subr.bf16.mxu0 %v1407
      %1549 = vmatpush1.bf16.msra.mxu0 %v1406
      %1550 = vmatprep.subr.bf16.mxu0 %v1437
      %1551 = vmatpush2.bf16.msra.mxu0 %v1436
      %1552 = vmatprep.subr.bf16.mxu0 %v1435
      %1553 = vmatpush2.bf16.msra.mxu0 %v1434
      %1554 = vmatprep.subr.bf16.mxu0 %v1433
      %1555 = vmatpush2.bf16.msra.mxu0 %v1432
      %1556 = vmatprep.subr.bf16.mxu0 %v1431
      %1557 = vmatpush2.bf16.msra.mxu0 %v1430
      %1558 = vmatprep.subr.bf16.mxu0 %v1429
      %1559 = vmatpush2.bf16.msra.mxu0 %v1428
      %1560 = vmatprep.subr.bf16.mxu0 %v1427
      %1561 = vmatpush2.bf16.msra.mxu0 %v1426
      %1562 = vmatprep.subr.bf16.mxu0 %v1425
      %1563 = vmatpush2.bf16.msra.mxu0 %v1424
      %1564 = vmatprep.subr.bf16.mxu0 %v1423
      %1565 = vmatpush2.bf16.msra.mxu0 %v1422
      %1566 = vmatprep.mubr.bf16.mxu0 %v1075
      %1567 = vmatmul.mubr.bf16.gmra.mxu0 %v1074
      %v1568 = vpop.f32.mrf.mxu0
      %v1569 = vadd.f32 %v1207, %v1568
      %v1570 = vpop.f32.mrf.mxu0
      %v1571 = vadd.f32 %v1211, %v1570
      %v1572 = vpop.f32.mrf.mxu0
      %v1573 = vadd.f32 %v1207, %v1572
      %v1574 = vpop.f32.mrf.mxu0
      %v1575 = vadd.f32 %v1211, %v1574
      %1576 = vmatprep.mubr.bf16.mxu0 %v1079
      %1577 = vmatmul.mubr.bf16.gmra.mxu0 %v1078
      %v1578 = vpop.f32.mrf.mxu0
      %v1579 = vadd.f32 %v1207, %v1578
      %v1580 = vpop.f32.mrf.mxu0
      %v1581 = vadd.f32 %v1211, %v1580
      %v1582 = vpop.f32.mrf.mxu0
      %v1583 = vadd.f32 %v1207, %v1582
      %v1584 = vpop.f32.mrf.mxu0
      %v1585 = vadd.f32 %v1211, %v1584
      %1586 = vmatprep.mubr.bf16.mxu0 %v1083
      %1587 = vmatmul.mubr.bf16.gmra.mxu0 %v1082
      %v1588 = vpop.f32.mrf.mxu0
      %v1589 = vadd.f32 %v1207, %v1588
      %v1590 = vpop.f32.mrf.mxu0
      %v1591 = vadd.f32 %v1211, %v1590
      %v1592 = vpop.f32.mrf.mxu0
      %v1593 = vadd.f32 %v1207, %v1592
      %v1594 = vpop.f32.mrf.mxu0
      %v1595 = vadd.f32 %v1211, %v1594
      %1596 = vmatprep.mubr.bf16.mxu0 %v1087
      %1597 = vmatmul.mubr.bf16.gmra.mxu0 %v1086
      %v1598 = vpop.f32.mrf.mxu0
      %v1599 = vadd.f32 %v1207, %v1598
      %v1600 = vpop.f32.mrf.mxu0
      %v1601 = vadd.f32 %v1211, %v1600
      %v1602 = vpop.f32.mrf.mxu0
      %v1603 = vadd.f32 %v1207, %v1602
      %v1604 = vpop.f32.mrf.mxu0
      %v1605 = vadd.f32 %v1211, %v1604
      %1606 = vmatprep.mubr.bf16.mxu0 %v1091
      %1607 = vmatmul.mubr.bf16.gmra.mxu0 %v1090
      %v1608 = vpop.f32.mrf.mxu0
      %v1609 = vadd.f32 %v1207, %v1608
      %v1610 = vpop.f32.mrf.mxu0
      %v1611 = vadd.f32 %v1211, %v1610
      %v1612 = vpop.f32.mrf.mxu0
      %v1613 = vadd.f32 %v1207, %v1612
      %v1614 = vpop.f32.mrf.mxu0
      %v1615 = vadd.f32 %v1211, %v1614
      %1616 = vmatprep.mubr.bf16.mxu0 %v1095
      %1617 = vmatmul.mubr.bf16.gmra.mxu0 %v1094
      %v1618 = vpop.f32.mrf.mxu0
      %v1619 = vadd.f32 %v1207, %v1618
      %v1620 = vpop.f32.mrf.mxu0
      %v1621 = vadd.f32 %v1211, %v1620
      %v1622 = vpop.f32.mrf.mxu0
      %v1623 = vadd.f32 %v1207, %v1622
      %v1624 = vpop.f32.mrf.mxu0
      %v1625 = vadd.f32 %v1211, %v1624
      %1626 = vmatprep.mubr.bf16.mxu0 %v1099
      %1627 = vmatmul.mubr.bf16.gmra.mxu0 %v1098
      %v1628 = vpop.f32.mrf.mxu0
      %v1629 = vadd.f32 %v1207, %v1628
      %v1630 = vpop.f32.mrf.mxu0
      %v1631 = vadd.f32 %v1211, %v1630
      %v1632 = vpop.f32.mrf.mxu0
      %v1633 = vadd.f32 %v1207, %v1632
      %v1634 = vpop.f32.mrf.mxu0
      %v1635 = vadd.f32 %v1211, %v1634
      %1636 = vmatprep.mubr.bf16.mxu0 %v1103
      %1637 = vmatmul.mubr.bf16.gmra.mxu0 %v1102
      %v1638 = vpop.f32.mrf.mxu0
      %v1639 = vadd.f32 %v1207, %v1638
      %v1640 = vpop.f32.mrf.mxu0
      %v1641 = vadd.f32 %v1211, %v1640
      %v1642 = vpop.f32.mrf.mxu0
      %v1643 = vadd.f32 %v1207, %v1642
      %v1644 = vpop.f32.mrf.mxu0
      %v1645 = vadd.f32 %v1211, %v1644
      %1646 = vmatprep.mubr.bf16.mxu0 %v1107
      %1647 = vmatmul.mubr.bf16.gmra.mxu0 %v1106
      %v1648 = vpop.f32.mrf.mxu0
      %v1649 = vadd.f32 %v1207, %v1648
      %v1650 = vpop.f32.mrf.mxu0
      %v1651 = vadd.f32 %v1211, %v1650
      %v1652 = vpop.f32.mrf.mxu0
      %v1653 = vadd.f32 %v1207, %v1652
      %v1654 = vpop.f32.mrf.mxu0
      %v1655 = vadd.f32 %v1211, %v1654
      %1656 = vmatprep.mubr.bf16.mxu0 %v1111
      %1657 = vmatmul.mubr.bf16.gmra.mxu0 %v1110
      %v1658 = vpop.f32.mrf.mxu0
      %v1659 = vadd.f32 %v1207, %v1658
      %v1660 = vpop.f32.mrf.mxu0
      %v1661 = vadd.f32 %v1211, %v1660
      %v1662 = vpop.f32.mrf.mxu0
      %v1663 = vadd.f32 %v1207, %v1662
      %v1664 = vpop.f32.mrf.mxu0
      %v1665 = vadd.f32 %v1211, %v1664
      %1666 = vmatprep.mubr.bf16.mxu0 %v1115
      %1667 = vmatmul.mubr.bf16.gmra.mxu0 %v1114
      %v1668 = vpop.f32.mrf.mxu0
      %v1669 = vadd.f32 %v1207, %v1668
      %v1670 = vpop.f32.mrf.mxu0
      %v1671 = vadd.f32 %v1211, %v1670
      %v1672 = vpop.f32.mrf.mxu0
      %v1673 = vadd.f32 %v1207, %v1672
      %v1674 = vpop.f32.mrf.mxu0
      %v1675 = vadd.f32 %v1211, %v1674
      %1676 = vmatprep.mubr.bf16.mxu0 %v1119
      %1677 = vmatmul.mubr.bf16.gmra.mxu0 %v1118
      %v1678 = vpop.f32.mrf.mxu0
      %v1679 = vadd.f32 %v1207, %v1678
      %v1680 = vpop.f32.mrf.mxu0
      %v1681 = vadd.f32 %v1211, %v1680
      %v1682 = vpop.f32.mrf.mxu0
      %v1683 = vadd.f32 %v1207, %v1682
      %v1684 = vpop.f32.mrf.mxu0
      %v1685 = vadd.f32 %v1211, %v1684
      %1686 = vmatprep.mubr.bf16.mxu0 %v1123
      %1687 = vmatmul.mubr.bf16.gmra.mxu0 %v1122
      %v1688 = vpop.f32.mrf.mxu0
      %v1689 = vadd.f32 %v1207, %v1688
      %v1690 = vpop.f32.mrf.mxu0
      %v1691 = vadd.f32 %v1211, %v1690
      %v1692 = vpop.f32.mrf.mxu0
      %v1693 = vadd.f32 %v1207, %v1692
      %v1694 = vpop.f32.mrf.mxu0
      %v1695 = vadd.f32 %v1211, %v1694
      %1696 = vmatprep.mubr.bf16.mxu0 %v1127
      %1697 = vmatmul.mubr.bf16.gmra.mxu0 %v1126
      %v1698 = vpop.f32.mrf.mxu0
      %v1699 = vadd.f32 %v1207, %v1698
      %v1700 = vpop.f32.mrf.mxu0
      %v1701 = vadd.f32 %v1211, %v1700
      %v1702 = vpop.f32.mrf.mxu0
      %v1703 = vadd.f32 %v1207, %v1702
      %v1704 = vpop.f32.mrf.mxu0
      %v1705 = vadd.f32 %v1211, %v1704
      %1706 = vmatprep.mubr.bf16.mxu0 %v1131
      %1707 = vmatmul.mubr.bf16.gmra.mxu0 %v1130
      %v1708 = vpop.f32.mrf.mxu0
      %v1709 = vadd.f32 %v1207, %v1708
      %v1710 = vpop.f32.mrf.mxu0
      %v1711 = vadd.f32 %v1211, %v1710
      %v1712 = vpop.f32.mrf.mxu0
      %v1713 = vadd.f32 %v1207, %v1712
      %v1714 = vpop.f32.mrf.mxu0
      %v1715 = vadd.f32 %v1211, %v1714
      %1716 = vmatprep.mubr.bf16.mxu0 %v1135
      %1717 = vmatmul.mubr.bf16.gmra.mxu0 %v1134
      %v1718 = vpop.f32.mrf.mxu0
      %v1719 = vadd.f32 %v1207, %v1718
      %v1720 = vpop.f32.mrf.mxu0
      %v1721 = vadd.f32 %v1211, %v1720
      %v1722 = vpop.f32.mrf.mxu0
      %v1723 = vadd.f32 %v1207, %v1722
      %v1724 = vpop.f32.mrf.mxu0
      %v1725 = vadd.f32 %v1211, %v1724
      %1726 = vdwg.mxu0
      %1727 = vmatprep.subr.bf16.mxu0 %v1453
      %1728 = vmatpush1.bf16.msra.mxu0 %v1452
      %1729 = vmatprep.subr.bf16.mxu0 %v1451
      %1730 = vmatpush1.bf16.msra.mxu0 %v1450
      %1731 = vmatprep.subr.bf16.mxu0 %v1449
      %1732 = vmatpush1.bf16.msra.mxu0 %v1448
      %1733 = vmatprep.subr.bf16.mxu0 %v1447
      %1734 = vmatpush1.bf16.msra.mxu0 %v1446
      %1735 = vmatprep.subr.bf16.mxu0 %v1445
      %1736 = vmatpush1.bf16.msra.mxu0 %v1444
      %1737 = vmatprep.subr.bf16.mxu0 %v1443
      %1738 = vmatpush1.bf16.msra.mxu0 %v1442
      %1739 = vmatprep.subr.bf16.mxu0 %v1441
      %1740 = vmatpush1.bf16.msra.mxu0 %v1440
      %1741 = vmatprep.subr.bf16.mxu0 %v1439
      %1742 = vmatpush1.bf16.msra.mxu0 %v1438
      %1743 = vmatprep.subr.bf16.mxu0 %v1469
      %1744 = vmatpush2.bf16.msra.mxu0 %v1468
      %1745 = vmatprep.subr.bf16.mxu0 %v1467
      %1746 = vmatpush2.bf16.msra.mxu0 %v1466
      %1747 = vmatprep.subr.bf16.mxu0 %v1465
      %1748 = vmatpush2.bf16.msra.mxu0 %v1464
      %1749 = vmatprep.subr.bf16.mxu0 %v1463
      %1750 = vmatpush2.bf16.msra.mxu0 %v1462
      %1751 = vmatprep.subr.bf16.mxu0 %v1461
      %1752 = vmatpush2.bf16.msra.mxu0 %v1460
      %1753 = vmatprep.subr.bf16.mxu0 %v1459
      %1754 = vmatpush2.bf16.msra.mxu0 %v1458
      %1755 = vmatprep.subr.bf16.mxu0 %v1457
      %1756 = vmatpush2.bf16.msra.mxu0 %v1456
      %1757 = vmatprep.subr.bf16.mxu0 %v1455
      %1758 = vmatpush2.bf16.msra.mxu0 %v1454
      %1759 = vmatprep.mubr.bf16.mxu0 %v1077
      %1760 = vmatmul.mubr.bf16.gmra.mxu0 %v1076
      %v1761 = vpop.f32.mrf.mxu0
      %v1762 = vadd.f32 %v1569, %v1761
      %v1763 = vpop.f32.mrf.mxu0
      %v1764 = vadd.f32 %v1571, %v1763
      %v1765 = vpop.f32.mrf.mxu0
      %v1766 = vadd.f32 %v1573, %v1765
      %v1767 = vpop.f32.mrf.mxu0
      %v1768 = vadd.f32 %v1575, %v1767
      %1769 = vmatprep.mubr.bf16.mxu0 %v1081
      %1770 = vmatmul.mubr.bf16.gmra.mxu0 %v1080
      %v1771 = vpop.f32.mrf.mxu0
      %v1772 = vadd.f32 %v1579, %v1771
      %v1773 = vpop.f32.mrf.mxu0
      %v1774 = vadd.f32 %v1581, %v1773
      %v1775 = vpop.f32.mrf.mxu0
      %v1776 = vadd.f32 %v1583, %v1775
      %v1777 = vpop.f32.mrf.mxu0
      %v1778 = vadd.f32 %v1585, %v1777
      %1779 = vmatprep.mubr.bf16.mxu0 %v1085
      %1780 = vmatmul.mubr.bf16.gmra.mxu0 %v1084
      %v1781 = vpop.f32.mrf.mxu0
      %v1782 = vadd.f32 %v1589, %v1781
      %v1783 = vpop.f32.mrf.mxu0
      %v1784 = vadd.f32 %v1591, %v1783
      %v1785 = vpop.f32.mrf.mxu0
      %v1786 = vadd.f32 %v1593, %v1785
      %v1787 = vpop.f32.mrf.mxu0
      %v1788 = vadd.f32 %v1595, %v1787
      %1789 = vmatprep.mubr.bf16.mxu0 %v1089
      %1790 = vmatmul.mubr.bf16.gmra.mxu0 %v1088
      %v1791 = vpop.f32.mrf.mxu0
      %v1792 = vadd.f32 %v1599, %v1791
      %v1793 = vpop.f32.mrf.mxu0
      %v1794 = vadd.f32 %v1601, %v1793
      %v1795 = vpop.f32.mrf.mxu0
      %v1796 = vadd.f32 %v1603, %v1795
      %v1797 = vpop.f32.mrf.mxu0
      %v1798 = vadd.f32 %v1605, %v1797
      %1799 = vmatprep.mubr.bf16.mxu0 %v1093
      %1800 = vmatmul.mubr.bf16.gmra.mxu0 %v1092
      %v1801 = vpop.f32.mrf.mxu0
      %v1802 = vadd.f32 %v1609, %v1801
      %v1803 = vpop.f32.mrf.mxu0
      %v1804 = vadd.f32 %v1611, %v1803
      %v1805 = vpop.f32.mrf.mxu0
      %v1806 = vadd.f32 %v1613, %v1805
      %v1807 = vpop.f32.mrf.mxu0
      %v1808 = vadd.f32 %v1615, %v1807
      %1809 = vmatprep.mubr.bf16.mxu0 %v1097
      %1810 = vmatmul.mubr.bf16.gmra.mxu0 %v1096
      %v1811 = vpop.f32.mrf.mxu0
      %v1812 = vadd.f32 %v1619, %v1811
      %v1813 = vpop.f32.mrf.mxu0
      %v1814 = vadd.f32 %v1621, %v1813
      %v1815 = vpop.f32.mrf.mxu0
      %v1816 = vadd.f32 %v1623, %v1815
      %v1817 = vpop.f32.mrf.mxu0
      %v1818 = vadd.f32 %v1625, %v1817
      %1819 = vmatprep.mubr.bf16.mxu0 %v1101
      %1820 = vmatmul.mubr.bf16.gmra.mxu0 %v1100
      %v1821 = vpop.f32.mrf.mxu0
      %v1822 = vadd.f32 %v1629, %v1821
      %v1823 = vpop.f32.mrf.mxu0
      %v1824 = vadd.f32 %v1631, %v1823
      %v1825 = vpop.f32.mrf.mxu0
      %v1826 = vadd.f32 %v1633, %v1825
      %v1827 = vpop.f32.mrf.mxu0
      %v1828 = vadd.f32 %v1635, %v1827
      %1829 = vmatprep.mubr.bf16.mxu0 %v1105
      %1830 = vmatmul.mubr.bf16.gmra.mxu0 %v1104
      %v1831 = vpop.f32.mrf.mxu0
      %v1832 = vadd.f32 %v1639, %v1831
      %v1833 = vpop.f32.mrf.mxu0
      %v1834 = vadd.f32 %v1641, %v1833
      %v1835 = vpop.f32.mrf.mxu0
      %v1836 = vadd.f32 %v1643, %v1835
      %v1837 = vpop.f32.mrf.mxu0
      %v1838 = vadd.f32 %v1645, %v1837
      %1839 = vmatprep.mubr.bf16.mxu0 %v1109
      %1840 = vmatmul.mubr.bf16.gmra.mxu0 %v1108
      %v1841 = vpop.f32.mrf.mxu0
      %v1842 = vadd.f32 %v1649, %v1841
      %v1843 = vpop.f32.mrf.mxu0
      %v1844 = vadd.f32 %v1651, %v1843
      %v1845 = vpop.f32.mrf.mxu0
      %v1846 = vadd.f32 %v1653, %v1845
      %v1847 = vpop.f32.mrf.mxu0
      %v1848 = vadd.f32 %v1655, %v1847
      %1849 = vmatprep.mubr.bf16.mxu0 %v1113
      %1850 = vmatmul.mubr.bf16.gmra.mxu0 %v1112
      %v1851 = vpop.f32.mrf.mxu0
      %v1852 = vadd.f32 %v1659, %v1851
      %v1853 = vpop.f32.mrf.mxu0
      %v1854 = vadd.f32 %v1661, %v1853
      %v1855 = vpop.f32.mrf.mxu0
      %v1856 = vadd.f32 %v1663, %v1855
      %v1857 = vpop.f32.mrf.mxu0
      %v1858 = vadd.f32 %v1665, %v1857
      %1859 = vmatprep.mubr.bf16.mxu0 %v1117
      %1860 = vmatmul.mubr.bf16.gmra.mxu0 %v1116
      %v1861 = vpop.f32.mrf.mxu0
      %v1862 = vadd.f32 %v1669, %v1861
      %v1863 = vpop.f32.mrf.mxu0
      %v1864 = vadd.f32 %v1671, %v1863
      %v1865 = vpop.f32.mrf.mxu0
      %v1866 = vadd.f32 %v1673, %v1865
      %v1867 = vpop.f32.mrf.mxu0
      %v1868 = vadd.f32 %v1675, %v1867
      %1869 = vmatprep.mubr.bf16.mxu0 %v1121
      %1870 = vmatmul.mubr.bf16.gmra.mxu0 %v1120
      %v1871 = vpop.f32.mrf.mxu0
      %v1872 = vadd.f32 %v1679, %v1871
      %v1873 = vpop.f32.mrf.mxu0
      %v1874 = vadd.f32 %v1681, %v1873
      %v1875 = vpop.f32.mrf.mxu0
      %v1876 = vadd.f32 %v1683, %v1875
      %v1877 = vpop.f32.mrf.mxu0
      %v1878 = vadd.f32 %v1685, %v1877
      %1879 = vmatprep.mubr.bf16.mxu0 %v1125
      %1880 = vmatmul.mubr.bf16.gmra.mxu0 %v1124
      %v1881 = vpop.f32.mrf.mxu0
      %v1882 = vadd.f32 %v1689, %v1881
      %v1883 = vpop.f32.mrf.mxu0
      %v1884 = vadd.f32 %v1691, %v1883
      %v1885 = vpop.f32.mrf.mxu0
      %v1886 = vadd.f32 %v1693, %v1885
      %v1887 = vpop.f32.mrf.mxu0
      %v1888 = vadd.f32 %v1695, %v1887
      %1889 = vmatprep.mubr.bf16.mxu0 %v1129
      %1890 = vmatmul.mubr.bf16.gmra.mxu0 %v1128
      %v1891 = vpop.f32.mrf.mxu0
      %v1892 = vadd.f32 %v1699, %v1891
      %v1893 = vpop.f32.mrf.mxu0
      %v1894 = vadd.f32 %v1701, %v1893
      %v1895 = vpop.f32.mrf.mxu0
      %v1896 = vadd.f32 %v1703, %v1895
      %v1897 = vpop.f32.mrf.mxu0
      %v1898 = vadd.f32 %v1705, %v1897
      %1899 = vmatprep.mubr.bf16.mxu0 %v1133
      %1900 = vmatmul.mubr.bf16.gmra.mxu0 %v1132
      %v1901 = vpop.f32.mrf.mxu0
      %v1902 = vadd.f32 %v1709, %v1901
      %v1903 = vpop.f32.mrf.mxu0
      %v1904 = vadd.f32 %v1711, %v1903
      %v1905 = vpop.f32.mrf.mxu0
      %v1906 = vadd.f32 %v1713, %v1905
      %v1907 = vpop.f32.mrf.mxu0
      %v1908 = vadd.f32 %v1715, %v1907
      %1909 = vmatprep.mubr.bf16.mxu0 %v1137
      %1910 = vmatmul.mubr.bf16.gmra.mxu0 %v1136
      %v1911 = vpop.f32.mrf.mxu0
      %v1912 = vadd.f32 %v1719, %v1911
      %v1913 = vpop.f32.mrf.mxu0
      %v1914 = vadd.f32 %v1721, %v1913
      %v1915 = vpop.f32.mrf.mxu0
      %v1916 = vadd.f32 %v1723, %v1915
      %v1917 = vpop.f32.mrf.mxu0
      %v1918 = vadd.f32 %v1725, %v1917
      %1919 = vdwg.mxu0
      %v1920 = vmax.f32 %v1762, 0.0
      %v1921 = vmax.f32 %v1764, 0.0
      %v1922 = vmax.f32 %v1766, 0.0
      %v1923 = vmax.f32 %v1768, 0.0
      %v1924 = vmax.f32 %v1772, 0.0
      %v1925 = vmax.f32 %v1774, 0.0
      %v1926 = vmax.f32 %v1776, 0.0
      %v1927 = vmax.f32 %v1778, 0.0
      %v1928 = vmax.f32 %v1782, 0.0
      %v1929 = vmax.f32 %v1784, 0.0
      %v1930 = vmax.f32 %v1786, 0.0
      %v1931 = vmax.f32 %v1788, 0.0
      %v1932 = vmax.f32 %v1792, 0.0
      %v1933 = vmax.f32 %v1794, 0.0
      %v1934 = vmax.f32 %v1796, 0.0
      %v1935 = vmax.f32 %v1798, 0.0
      %v1936 = vmax.f32 %v1802, 0.0
      %v1937 = vmax.f32 %v1804, 0.0
      %v1938 = vmax.f32 %v1806, 0.0
      %v1939 = vmax.f32 %v1808, 0.0
      %v1940 = vmax.f32 %v1812, 0.0
      %v1941 = vmax.f32 %v1814, 0.0
      %v1942 = vmax.f32 %v1816, 0.0
      %v1943 = vmax.f32 %v1818, 0.0
      %v1944 = vmax.f32 %v1822, 0.0
      %v1945 = vmax.f32 %v1824, 0.0
      %v1946 = vmax.f32 %v1826, 0.0
      %v1947 = vmax.f32 %v1828, 0.0
      %v1948 = vmax.f32 %v1832, 0.0
      %v1949 = vmax.f32 %v1834, 0.0
      %v1950 = vmax.f32 %v1836, 0.0
      %v1951 = vmax.f32 %v1838, 0.0
      %v1952 = vmax.f32 %v1842, 0.0
      %v1953 = vmax.f32 %v1844, 0.0
      %v1954 = vmax.f32 %v1846, 0.0
      %v1955 = vmax.f32 %v1848, 0.0
      %v1956 = vmax.f32 %v1852, 0.0
      %v1957 = vmax.f32 %v1854, 0.0
      %v1958 = vmax.f32 %v1856, 0.0
      %v1959 = vmax.f32 %v1858, 0.0
      %v1960 = vmax.f32 %v1862, 0.0
      %v1961 = vmax.f32 %v1864, 0.0
      %v1962 = vmax.f32 %v1866, 0.0
      %v1963 = vmax.f32 %v1868, 0.0
      %v1964 = vmax.f32 %v1872, 0.0
      %v1965 = vmax.f32 %v1874, 0.0
      %v1966 = vmax.f32 %v1876, 0.0
      %v1967 = vmax.f32 %v1878, 0.0
      %v1968 = vmax.f32 %v1882, 0.0
      %v1969 = vmax.f32 %v1884, 0.0
      %v1970 = vmax.f32 %v1886, 0.0
      %v1971 = vmax.f32 %v1888, 0.0
      %v1972 = vmax.f32 %v1892, 0.0
      %v1973 = vmax.f32 %v1894, 0.0
      %v1974 = vmax.f32 %v1896, 0.0
      %v1975 = vmax.f32 %v1898, 0.0
      %v1976 = vmax.f32 %v1902, 0.0
      %v1977 = vmax.f32 %v1904, 0.0
      %v1978 = vmax.f32 %v1906, 0.0
      %v1979 = vmax.f32 %v1908, 0.0
      %v1980 = vmax.f32 %v1912, 0.0
      %v1981 = vmax.f32 %v1914, 0.0
      %v1982 = vmax.f32 %v1916, 0.0
      %v1983 = vmax.f32 %v1918, 0.0
      %v1984 = vpack.c.bf16 %v1922, %v1920
      %v1985 = vpack.c.bf16 %v1923, %v1921
      %v1986 = vpack.c.bf16 %v1926, %v1924
      %v1987 = vpack.c.bf16 %v1927, %v1925
      %v1988 = vpack.c.bf16 %v1930, %v1928
      %v1989 = vpack.c.bf16 %v1931, %v1929
      %v1990 = vpack.c.bf16 %v1934, %v1932
      %v1991 = vpack.c.bf16 %v1935, %v1933
      %v1992 = vpack.c.bf16 %v1938, %v1936
      %v1993 = vpack.c.bf16 %v1939, %v1937
      %v1994 = vpack.c.bf16 %v1942, %v1940
      %v1995 = vpack.c.bf16 %v1943, %v1941
      %v1996 = vpack.c.bf16 %v1946, %v1944
      %v1997 = vpack.c.bf16 %v1947, %v1945
      %v1998 = vpack.c.bf16 %v1950, %v1948
      %v1999 = vpack.c.bf16 %v1951, %v1949
      %v2000 = vpack.c.bf16 %v1954, %v1952
      %v2001 = vpack.c.bf16 %v1955, %v1953
      %v2002 = vpack.c.bf16 %v1958, %v1956
      %v2003 = vpack.c.bf16 %v1959, %v1957
      %v2004 = vpack.c.bf16 %v1962, %v1960
      %v2005 = vpack.c.bf16 %v1963, %v1961
      %v2006 = vpack.c.bf16 %v1966, %v1964
      %v2007 = vpack.c.bf16 %v1967, %v1965
      %v2008 = vpack.c.bf16 %v1970, %v1968
      %v2009 = vpack.c.bf16 %v1971, %v1969
      %v2010 = vpack.c.bf16 %v1974, %v1972
      %v2011 = vpack.c.bf16 %v1975, %v1973
      %v2012 = vpack.c.bf16 %v1978, %v1976
      %v2013 = vpack.c.bf16 %v1979, %v1977
      %v2014 = vpack.c.bf16 %v1982, %v1980
      %v2015 = vpack.c.bf16 %v1983, %v1981
      %v2016 = vld [vmem:[%s5] sm:$0xf]
      %v2017 = vld [vmem:[%s5 + $0x4] sm:$0xf]
      %v2018 = vld [vmem:[%s5 + $0x8] sm:$0xf]
      %v2019 = vld [vmem:[%s5 + $0xc] sm:$0xf]
      %v2020 = vld [vmem:[%s5 + $0x10] sm:$0xf]
      %v2021 = vld [vmem:[%s5 + $0x14] sm:$0xf]
      %v2022 = vld [vmem:[%s5 + $0x18] sm:$0xf]
      %v2023 = vld [vmem:[%s5 + $0x1c] sm:$0xf]
      %v2024 = vld [vmem:[%s5 + $0x20] sm:$0xf]
      %v2025 = vld [vmem:[%s5 + $0x24] sm:$0xf]
      %v2026 = vld [vmem:[%s5 + $0x28] sm:$0xf]
      %v2027 = vld [vmem:[%s5 + $0x2c] sm:$0xf]
      %v2028 = vld [vmem:[%s5 + $0x30] sm:$0xf]
      %v2029 = vld [vmem:[%s5 + $0x34] sm:$0xf]
      %v2030 = vld [vmem:[%s5 + $0x38] sm:$0xf]
      %v2031 = vld [vmem:[%s5 + $0x3c] sm:$0xf]
      %v2032 = vld [vmem:[%s5 + $0x40] sm:$0xf]
      %v2033 = vld [vmem:[%s5 + $0x44] sm:$0xf]
      %v2034 = vld [vmem:[%s5 + $0x48] sm:$0xf]
      %v2035 = vld [vmem:[%s5 + $0x4c] sm:$0xf]
      %v2036 = vld [vmem:[%s5 + $0x50] sm:$0xf]
      %v2037 = vld [vmem:[%s5 + $0x54] sm:$0xf]
      %v2038 = vld [vmem:[%s5 + $0x58] sm:$0xf]
      %v2039 = vld [vmem:[%s5 + $0x5c] sm:$0xf]
      %v2040 = vld [vmem:[%s5 + $0x60] sm:$0xf]
      %v2041 = vld [vmem:[%s5 + $0x64] sm:$0xf]
      %v2042 = vld [vmem:[%s5 + $0x68] sm:$0xf]
      %v2043 = vld [vmem:[%s5 + $0x6c] sm:$0xf]
      %v2044 = vld [vmem:[%s5 + $0x70] sm:$0xf]
      %v2045 = vld [vmem:[%s5 + $0x74] sm:$0xf]
      %v2046 = vld [vmem:[%s5 + $0x78] sm:$0xf]
      %v2047 = vld [vmem:[%s5 + $0x7c] sm:$0xf]
      %v2048 = vld [vmem:[%s6] sm:$0x1]
      %v2050 = vlaneseq
      %v2051 = vshrl.u32 %v2050, 7
      %v2052 = vsub.s32 0, %v2051
      %v2053 = vrot.slane %v2048, %v2052
      %v2087 = vunpack.c.l.b16 %v2016
      %v2088 = vunpack.c.l.b16 %v2017
      %v2089 = vunpack.c.l.b16 %v2018
      %v2090 = vunpack.c.l.b16 %v2019
      %v2091 = vunpack.c.l.b16 %v2020
      %v2092 = vunpack.c.l.b16 %v2021
      %v2093 = vunpack.c.l.b16 %v2022
      %v2094 = vunpack.c.l.b16 %v2023
      %v2095 = vunpack.c.l.b16 %v2024
      %v2096 = vunpack.c.l.b16 %v2025
      %v2097 = vunpack.c.l.b16 %v2026
      %v2098 = vunpack.c.l.b16 %v2027
      %v2099 = vunpack.c.l.b16 %v2028
      %v2100 = vunpack.c.l.b16 %v2029
      %v2101 = vunpack.c.l.b16 %v2030
      %v2102 = vunpack.c.l.b16 %v2031
      %v2103 = vunpack.c.l.b16 %v2032
      %v2104 = vunpack.c.l.b16 %v2033
      %v2105 = vunpack.c.l.b16 %v2034
      %v2106 = vunpack.c.l.b16 %v2035
      %v2107 = vunpack.c.l.b16 %v2036
      %v2108 = vunpack.c.l.b16 %v2037
      %v2109 = vunpack.c.l.b16 %v2038
      %v2110 = vunpack.c.l.b16 %v2039
      %v2111 = vunpack.c.l.b16 %v2040
      %v2112 = vunpack.c.l.b16 %v2041
      %v2113 = vunpack.c.l.b16 %v2042
      %v2114 = vunpack.c.l.b16 %v2043
      %v2115 = vunpack.c.l.b16 %v2044
      %v2116 = vunpack.c.l.b16 %v2045
      %v2117 = vunpack.c.l.b16 %v2046
      %v2118 = vunpack.c.l.b16 %v2047
      %v2119 = vpack.c.b16 %v2088, %v2087
      %v2120 = vpack.c.b16 %v2090, %v2089
      %v2121 = vpack.c.b16 %v2092, %v2091
      %v2122 = vpack.c.b16 %v2094, %v2093
      %v2123 = vpack.c.b16 %v2096, %v2095
      %v2124 = vpack.c.b16 %v2098, %v2097
      %v2125 = vpack.c.b16 %v2100, %v2099
      %v2126 = vpack.c.b16 %v2102, %v2101
      %v2127 = vpack.c.b16 %v2104, %v2103
      %v2128 = vpack.c.b16 %v2106, %v2105
      %v2129 = vpack.c.b16 %v2108, %v2107
      %v2130 = vpack.c.b16 %v2110, %v2109
      %v2131 = vpack.c.b16 %v2112, %v2111
      %v2132 = vpack.c.b16 %v2114, %v2113
      %v2133 = vpack.c.b16 %v2116, %v2115
      %v2134 = vpack.c.b16 %v2118, %v2117
      %2151 = vmatprep.subr.bf16.mxu0 0
      %2152 = vmatpush1.bf16.msra.mxu0 %v2126
      %2153 = vmatprep.subr.bf16.mxu0 0
      %2154 = vmatpush1.bf16.msra.mxu0 %v2125
      %2155 = vmatprep.subr.bf16.mxu0 0
      %2156 = vmatpush1.bf16.msra.mxu0 %v2124
      %2157 = vmatprep.subr.bf16.mxu0 0
      %2158 = vmatpush1.bf16.msra.mxu0 %v2123
      %2159 = vmatprep.subr.bf16.mxu0 0
      %2160 = vmatpush1.bf16.msra.mxu0 %v2122
      %2161 = vmatprep.subr.bf16.mxu0 0
      %2162 = vmatpush1.bf16.msra.mxu0 %v2121
      %2163 = vmatprep.subr.bf16.mxu0 0
      %2164 = vmatpush1.bf16.msra.mxu0 %v2120
      %2165 = vmatprep.subr.bf16.mxu0 0
      %2166 = vmatpush1.bf16.msra.mxu0 %v2119
      %2167 = vmatprep.subr.bf16.mxu0 0
      %2168 = vmatpush2.bf16.msra.mxu0 %v2134
      %2169 = vmatprep.subr.bf16.mxu0 0
      %2170 = vmatpush2.bf16.msra.mxu0 %v2133
      %2171 = vmatprep.subr.bf16.mxu0 0
      %2172 = vmatpush2.bf16.msra.mxu0 %v2132
      %2173 = vmatprep.subr.bf16.mxu0 0
      %2174 = vmatpush2.bf16.msra.mxu0 %v2131
      %2175 = vmatprep.subr.bf16.mxu0 0
      %2176 = vmatpush2.bf16.msra.mxu0 %v2130
      %2177 = vmatprep.subr.bf16.mxu0 0
      %2178 = vmatpush2.bf16.msra.mxu0 %v2129
      %2179 = vmatprep.subr.bf16.mxu0 0
      %2180 = vmatpush2.bf16.msra.mxu0 %v2128
      %2181 = vmatprep.subr.bf16.mxu0 0
      %2182 = vmatpush2.bf16.msra.mxu0 %v2127
      %2183 = vmatprep.mubr.bf16.mxu0 %v1985
      %2184 = vmatmul.mubr.bf16.gmra.mxu0 %v1984
      %v2185 = vpop.f32.mrf.mxu0
      %v2186 = vadd.f32 %v2053, %v2185
      %v2187 = vpop.f32.mrf.mxu0
      %v2188 = vpop.f32.mrf.mxu0
      %v2189 = vadd.f32 %v2053, %v2188
      %v2190 = vpop.f32.mrf.mxu0
      %2191 = vmatprep.mubr.bf16.mxu0 %v1987
      %2192 = vmatmul.mubr.bf16.gmra.mxu0 %v1986
      %v2193 = vpop.f32.mrf.mxu0
      %v2194 = vadd.f32 %v2053, %v2193
      %v2195 = vpop.f32.mrf.mxu0
      %v2196 = vpop.f32.mrf.mxu0
      %v2197 = vadd.f32 %v2053, %v2196
      %v2198 = vpop.f32.mrf.mxu0
      %2199 = vmatprep.mubr.bf16.mxu0 %v1989
      %2200 = vmatmul.mubr.bf16.gmra.mxu0 %v1988
      %v2201 = vpop.f32.mrf.mxu0
      %v2202 = vadd.f32 %v2053, %v2201
      %v2203 = vpop.f32.mrf.mxu0
      %v2204 = vpop.f32.mrf.mxu0
      %v2205 = vadd.f32 %v2053, %v2204
      %v2206 = vpop.f32.mrf.mxu0
      %2207 = vmatprep.mubr.bf16.mxu0 %v1991
      %2208 = vmatmul.mubr.bf16.gmra.mxu0 %v1990
      %v2209 = vpop.f32.mrf.mxu0
      %v2210 = vadd.f32 %v2053, %v2209
      %v2211 = vpop.f32.mrf.mxu0
      %v2212 = vpop.f32.mrf.mxu0
      %v2213 = vadd.f32 %v2053, %v2212
      %v2214 = vpop.f32.mrf.mxu0
      %2215 = vmatprep.mubr.bf16.mxu0 %v1993
      %2216 = vmatmul.mubr.bf16.gmra.mxu0 %v1992
      %v2217 = vpop.f32.mrf.mxu0
      %v2218 = vadd.f32 %v2053, %v2217
      %v2219 = vpop.f32.mrf.mxu0
      %v2220 = vpop.f32.mrf.mxu0
      %v2221 = vadd.f32 %v2053, %v2220
      %v2222 = vpop.f32.mrf.mxu0
      %2223 = vmatprep.mubr.bf16.mxu0 %v1995
      %2224 = vmatmul.mubr.bf16.gmra.mxu0 %v1994
      %v2225 = vpop.f32.mrf.mxu0
      %v2226 = vadd.f32 %v2053, %v2225
      %v2227 = vpop.f32.mrf.mxu0
      %v2228 = vpop.f32.mrf.mxu0
      %v2229 = vadd.f32 %v2053, %v2228
      %v2230 = vpop.f32.mrf.mxu0
      %2231 = vmatprep.mubr.bf16.mxu0 %v1997
      %2232 = vmatmul.mubr.bf16.gmra.mxu0 %v1996
      %v2233 = vpop.f32.mrf.mxu0
      %v2234 = vadd.f32 %v2053, %v2233
      %v2235 = vpop.f32.mrf.mxu0
      %v2236 = vpop.f32.mrf.mxu0
      %v2237 = vadd.f32 %v2053, %v2236
      %v2238 = vpop.f32.mrf.mxu0
      %2239 = vmatprep.mubr.bf16.mxu0 %v1999
      %2240 = vmatmul.mubr.bf16.gmra.mxu0 %v1998
      %v2241 = vpop.f32.mrf.mxu0
      %v2242 = vadd.f32 %v2053, %v2241
      %v2243 = vpop.f32.mrf.mxu0
      %v2244 = vpop.f32.mrf.mxu0
      %v2245 = vadd.f32 %v2053, %v2244
      %v2246 = vpop.f32.mrf.mxu0
      %2247 = vmatprep.mubr.bf16.mxu0 %v2001
      %2248 = vmatmul.mubr.bf16.gmra.mxu0 %v2000
      %v2249 = vpop.f32.mrf.mxu0
      %v2250 = vadd.f32 %v2053, %v2249
      %v2251 = vpop.f32.mrf.mxu0
      %v2252 = vpop.f32.mrf.mxu0
      %v2253 = vadd.f32 %v2053, %v2252
      %v2254 = vpop.f32.mrf.mxu0
      %2255 = vmatprep.mubr.bf16.mxu0 %v2003
      %2256 = vmatmul.mubr.bf16.gmra.mxu0 %v2002
      %v2257 = vpop.f32.mrf.mxu0
      %v2258 = vadd.f32 %v2053, %v2257
      %v2259 = vpop.f32.mrf.mxu0
      %v2260 = vpop.f32.mrf.mxu0
      %v2261 = vadd.f32 %v2053, %v2260
      %v2262 = vpop.f32.mrf.mxu0
      %2263 = vmatprep.mubr.bf16.mxu0 %v2005
      %2264 = vmatmul.mubr.bf16.gmra.mxu0 %v2004
      %v2265 = vpop.f32.mrf.mxu0
      %v2266 = vadd.f32 %v2053, %v2265
      %v2267 = vpop.f32.mrf.mxu0
      %v2268 = vpop.f32.mrf.mxu0
      %v2269 = vadd.f32 %v2053, %v2268
      %v2270 = vpop.f32.mrf.mxu0
      %2271 = vmatprep.mubr.bf16.mxu0 %v2007
      %2272 = vmatmul.mubr.bf16.gmra.mxu0 %v2006
      %v2273 = vpop.f32.mrf.mxu0
      %v2274 = vadd.f32 %v2053, %v2273
      %v2275 = vpop.f32.mrf.mxu0
      %v2276 = vpop.f32.mrf.mxu0
      %v2277 = vadd.f32 %v2053, %v2276
      %v2278 = vpop.f32.mrf.mxu0
      %2279 = vmatprep.mubr.bf16.mxu0 %v2009
      %2280 = vmatmul.mubr.bf16.gmra.mxu0 %v2008
      %v2281 = vpop.f32.mrf.mxu0
      %v2282 = vadd.f32 %v2053, %v2281
      %v2283 = vpop.f32.mrf.mxu0
      %v2284 = vpop.f32.mrf.mxu0
      %v2285 = vadd.f32 %v2053, %v2284
      %v2286 = vpop.f32.mrf.mxu0
      %2287 = vmatprep.mubr.bf16.mxu0 %v2011
      %2288 = vmatmul.mubr.bf16.gmra.mxu0 %v2010
      %v2289 = vpop.f32.mrf.mxu0
      %v2290 = vadd.f32 %v2053, %v2289
      %v2291 = vpop.f32.mrf.mxu0
      %v2292 = vpop.f32.mrf.mxu0
      %v2293 = vadd.f32 %v2053, %v2292
      %v2294 = vpop.f32.mrf.mxu0
      %2295 = vmatprep.mubr.bf16.mxu0 %v2013
      %2296 = vmatmul.mubr.bf16.gmra.mxu0 %v2012
      %v2297 = vpop.f32.mrf.mxu0
      %v2298 = vadd.f32 %v2053, %v2297
      %v2299 = vpop.f32.mrf.mxu0
      %v2300 = vpop.f32.mrf.mxu0
      %v2301 = vadd.f32 %v2053, %v2300
      %v2302 = vpop.f32.mrf.mxu0
      %2303 = vmatprep.mubr.bf16.mxu0 %v2015
      %2304 = vmatmul.mubr.bf16.gmra.mxu0 %v2014
      %v2305 = vpop.f32.mrf.mxu0
      %v2306 = vadd.f32 %v2053, %v2305
      %v2307 = vpop.f32.mrf.mxu0
      %v2308 = vpop.f32.mrf.mxu0
      %v2309 = vadd.f32 %v2053, %v2308
      %v2310 = vpop.f32.mrf.mxu0
      %2311 = vdwg.mxu0
      %v2312 = vmax.f32 %v2186, 0.0
      %v2313 = vmax.f32 %v2189, 0.0
      %v2314 = vmax.f32 %v2194, 0.0
      %v2315 = vmax.f32 %v2197, 0.0
      %v2316 = vmax.f32 %v2202, 0.0
      %v2317 = vmax.f32 %v2205, 0.0
      %v2318 = vmax.f32 %v2210, 0.0
      %v2319 = vmax.f32 %v2213, 0.0
      %v2320 = vmax.f32 %v2218, 0.0
      %v2321 = vmax.f32 %v2221, 0.0
      %v2322 = vmax.f32 %v2226, 0.0
      %v2323 = vmax.f32 %v2229, 0.0
      %v2324 = vmax.f32 %v2234, 0.0
      %v2325 = vmax.f32 %v2237, 0.0
      %v2326 = vmax.f32 %v2242, 0.0
      %v2327 = vmax.f32 %v2245, 0.0
      %v2328 = vmax.f32 %v2250, 0.0
      %v2329 = vmax.f32 %v2253, 0.0
      %v2330 = vmax.f32 %v2258, 0.0
      %v2331 = vmax.f32 %v2261, 0.0
      %v2332 = vmax.f32 %v2266, 0.0
      %v2333 = vmax.f32 %v2269, 0.0
      %v2334 = vmax.f32 %v2274, 0.0
      %v2335 = vmax.f32 %v2277, 0.0
      %v2336 = vmax.f32 %v2282, 0.0
      %v2337 = vmax.f32 %v2285, 0.0
      %v2338 = vmax.f32 %v2290, 0.0
      %v2339 = vmax.f32 %v2293, 0.0
      %v2340 = vmax.f32 %v2298, 0.0
      %v2341 = vmax.f32 %v2301, 0.0
      %v2342 = vmax.f32 %v2306, 0.0
      %v2343 = vmax.f32 %v2309, 0.0
      %v2344 = vpack.c.bf16 %v2313, %v2312
      %v2345 = vpack.c.bf16 %v2315, %v2314
      %v2346 = vpack.c.bf16 %v2317, %v2316
      %v2347 = vpack.c.bf16 %v2319, %v2318
      %v2348 = vpack.c.bf16 %v2321, %v2320
      %v2349 = vpack.c.bf16 %v2323, %v2322
      %v2350 = vpack.c.bf16 %v2325, %v2324
      %v2351 = vpack.c.bf16 %v2327, %v2326
      %v2352 = vpack.c.bf16 %v2329, %v2328
      %v2353 = vpack.c.bf16 %v2331, %v2330
      %v2354 = vpack.c.bf16 %v2333, %v2332
      %v2355 = vpack.c.bf16 %v2335, %v2334
      %v2356 = vpack.c.bf16 %v2337, %v2336
      %v2357 = vpack.c.bf16 %v2339, %v2338
      %v2358 = vpack.c.bf16 %v2341, %v2340
      %v2359 = vpack.c.bf16 %v2343, %v2342
      %v2360 = vld [vmem:[%s7] sm:$0xf]
      %v2361 = vld [vmem:[%s7 + $0x4] sm:$0xf]
      %v2362 = vld [vmem:[%s7 + $0x8] sm:$0xf]
      %v2363 = vld [vmem:[%s7 + $0xc] sm:$0xf]
      %v2364 = vld [vmem:[%s7 + $0x10] sm:$0xf]
      %v2365 = vld [vmem:[%s7 + $0x14] sm:$0xf]
      %v2366 = vld [vmem:[%s7 + $0x18] sm:$0xf]
      %v2367 = vld [vmem:[%s7 + $0x1c] sm:$0xf]
      %v2368 = vld [vmem:[%s7 + $0x20] sm:$0xf]
      %v2369 = vld [vmem:[%s7 + $0x24] sm:$0xf]
      %v2370 = vld [vmem:[%s7 + $0x28] sm:$0xf]
      %v2371 = vld [vmem:[%s7 + $0x2c] sm:$0xf]
      %v2372 = vld [vmem:[%s7 + $0x30] sm:$0xf]
      %v2373 = vld [vmem:[%s7 + $0x34] sm:$0xf]
      %v2374 = vld [vmem:[%s7 + $0x38] sm:$0xf]
      %v2375 = vld [vmem:[%s7 + $0x3c] sm:$0xf]
      %v2376 = vld [vmem:[%s8] sm:$0x1]
      %v2378 = vlaneseq
      %v2379 = vshrl.u32 %v2378, 7
      %v2380 = vsub.s32 0, %v2379
      %v2381 = vrot.slane %v2376, %v2380
      %v2399 = vunpack.c.l.b16 %v2360
      %v2400 = vunpack.c.l.b16 %v2361
      %v2401 = vunpack.c.l.b16 %v2362
      %v2402 = vunpack.c.l.b16 %v2363
      %v2403 = vunpack.c.l.b16 %v2364
      %v2404 = vunpack.c.l.b16 %v2365
      %v2405 = vunpack.c.l.b16 %v2366
      %v2406 = vunpack.c.l.b16 %v2367
      %v2407 = vunpack.c.l.b16 %v2368
      %v2408 = vunpack.c.l.b16 %v2369
      %v2409 = vunpack.c.l.b16 %v2370
      %v2410 = vunpack.c.l.b16 %v2371
      %v2411 = vunpack.c.l.b16 %v2372
      %v2412 = vunpack.c.l.b16 %v2373
      %v2413 = vunpack.c.l.b16 %v2374
      %v2414 = vunpack.c.l.b16 %v2375
      %v2415 = vpack.c.b16 %v2400, %v2399
      %v2416 = vpack.c.b16 %v2402, %v2401
      %v2417 = vpack.c.b16 %v2404, %v2403
      %v2418 = vpack.c.b16 %v2406, %v2405
      %v2419 = vpack.c.b16 %v2408, %v2407
      %v2420 = vpack.c.b16 %v2410, %v2409
      %v2421 = vpack.c.b16 %v2412, %v2411
      %v2422 = vpack.c.b16 %v2414, %v2413
      %2431 = vmatprep.subr.bf16.mxu0 0
      %2432 = vmatpush1.bf16.msra.mxu0 %v2422
      %2433 = vmatprep.subr.bf16.mxu0 0
      %2434 = vmatpush1.bf16.msra.mxu0 %v2421
      %2435 = vmatprep.subr.bf16.mxu0 0
      %2436 = vmatpush1.bf16.msra.mxu0 %v2420
      %2437 = vmatprep.subr.bf16.mxu0 0
      %2438 = vmatpush1.bf16.msra.mxu0 %v2419
      %2439 = vmatprep.subr.bf16.mxu0 0
      %2440 = vmatpush1.bf16.msra.mxu0 %v2418
      %2441 = vmatprep.subr.bf16.mxu0 0
      %2442 = vmatpush1.bf16.msra.mxu0 %v2417
      %2443 = vmatprep.subr.bf16.mxu0 0
      %2444 = vmatpush1.bf16.msra.mxu0 %v2416
      %2445 = vmatprep.subr.bf16.mxu0 0
      %2446 = vmatpush1.bf16.msra.mxu0 %v2415
      %2447 = vmatprep.subr.bf16.mxu0 0
      %2448 = vmatpush2.bf16.msra.mxu0 0
      %2449 = vmatprep.subr.bf16.mxu0 0
      %2450 = vmatpush2.bf16.msra.mxu0 0
      %2451 = vmatprep.subr.bf16.mxu0 0
      %2452 = vmatpush2.bf16.msra.mxu0 0
      %2453 = vmatprep.subr.bf16.mxu0 0
      %2454 = vmatpush2.bf16.msra.mxu0 0
      %2455 = vmatprep.subr.bf16.mxu0 0
      %2456 = vmatpush2.bf16.msra.mxu0 0
      %2457 = vmatprep.subr.bf16.mxu0 0
      %2458 = vmatpush2.bf16.msra.mxu0 0
      %2459 = vmatprep.subr.bf16.mxu0 0
      %2460 = vmatpush2.bf16.msra.mxu0 0
      %2461 = vmatprep.subr.bf16.mxu0 0
      %2462 = vmatpush2.bf16.msra.mxu0 0
      %2463 = vmatprep.mubr.bf16.mxu0 0
      %2464 = vmatmul.mubr.bf16.gmra.mxu0 %v2344
      %v2465 = vpop.f32.mrf.mxu0
      %v2466 = vadd.f32 %v2381, %v2465
      %v2467 = vpop.f32.mrf.mxu0
      %v2468 = vpop.f32.mrf.mxu0
      %v2469 = vadd.f32 %v2381, %v2468
      %v2470 = vpop.f32.mrf.mxu0
      %2471 = vmatprep.mubr.bf16.mxu0 0
      %2472 = vmatmul.mubr.bf16.gmra.mxu0 %v2345
      %v2473 = vpop.f32.mrf.mxu0
      %v2474 = vadd.f32 %v2381, %v2473
      %v2475 = vpop.f32.mrf.mxu0
      %v2476 = vpop.f32.mrf.mxu0
      %v2477 = vadd.f32 %v2381, %v2476
      %v2478 = vpop.f32.mrf.mxu0
      %2479 = vmatprep.mubr.bf16.mxu0 0
      %2480 = vmatmul.mubr.bf16.gmra.mxu0 %v2346
      %v2481 = vpop.f32.mrf.mxu0
      %v2482 = vadd.f32 %v2381, %v2481
      %v2483 = vpop.f32.mrf.mxu0
      %v2484 = vpop.f32.mrf.mxu0
      %v2485 = vadd.f32 %v2381, %v2484
      %v2486 = vpop.f32.mrf.mxu0
      %2487 = vmatprep.mubr.bf16.mxu0 0
      %2488 = vmatmul.mubr.bf16.gmra.mxu0 %v2347
      %v2489 = vpop.f32.mrf.mxu0
      %v2490 = vadd.f32 %v2381, %v2489
      %v2491 = vpop.f32.mrf.mxu0
      %v2492 = vpop.f32.mrf.mxu0
      %v2493 = vadd.f32 %v2381, %v2492
      %v2494 = vpop.f32.mrf.mxu0
      %2495 = vmatprep.mubr.bf16.mxu0 0
      %2496 = vmatmul.mubr.bf16.gmra.mxu0 %v2348
      %v2497 = vpop.f32.mrf.mxu0
      %v2498 = vadd.f32 %v2381, %v2497
      %v2499 = vpop.f32.mrf.mxu0
      %v2500 = vpop.f32.mrf.mxu0
      %v2501 = vadd.f32 %v2381, %v2500
      %v2502 = vpop.f32.mrf.mxu0
      %2503 = vmatprep.mubr.bf16.mxu0 0
      %2504 = vmatmul.mubr.bf16.gmra.mxu0 %v2349
      %v2505 = vpop.f32.mrf.mxu0
      %v2506 = vadd.f32 %v2381, %v2505
      %v2507 = vpop.f32.mrf.mxu0
      %v2508 = vpop.f32.mrf.mxu0
      %v2509 = vadd.f32 %v2381, %v2508
      %v2510 = vpop.f32.mrf.mxu0
      %2511 = vmatprep.mubr.bf16.mxu0 0
      %2512 = vmatmul.mubr.bf16.gmra.mxu0 %v2350
      %v2513 = vpop.f32.mrf.mxu0
      %v2514 = vadd.f32 %v2381, %v2513
      %v2515 = vpop.f32.mrf.mxu0
      %v2516 = vpop.f32.mrf.mxu0
      %v2517 = vadd.f32 %v2381, %v2516
      %v2518 = vpop.f32.mrf.mxu0
      %2519 = vmatprep.mubr.bf16.mxu0 0
      %2520 = vmatmul.mubr.bf16.gmra.mxu0 %v2351
      %v2521 = vpop.f32.mrf.mxu0
      %v2522 = vadd.f32 %v2381, %v2521
      %v2523 = vpop.f32.mrf.mxu0
      %v2524 = vpop.f32.mrf.mxu0
      %v2525 = vadd.f32 %v2381, %v2524
      %v2526 = vpop.f32.mrf.mxu0
      %2527 = vmatprep.mubr.bf16.mxu0 0
      %2528 = vmatmul.mubr.bf16.gmra.mxu0 %v2352
      %v2529 = vpop.f32.mrf.mxu0
      %v2530 = vadd.f32 %v2381, %v2529
      %v2531 = vpop.f32.mrf.mxu0
      %v2532 = vpop.f32.mrf.mxu0
      %v2533 = vadd.f32 %v2381, %v2532
      %v2534 = vpop.f32.mrf.mxu0
      %2535 = vmatprep.mubr.bf16.mxu0 0
      %2536 = vmatmul.mubr.bf16.gmra.mxu0 %v2353
      %v2537 = vpop.f32.mrf.mxu0
      %v2538 = vadd.f32 %v2381, %v2537
      %v2539 = vpop.f32.mrf.mxu0
      %v2540 = vpop.f32.mrf.mxu0
      %v2541 = vadd.f32 %v2381, %v2540
      %v2542 = vpop.f32.mrf.mxu0
      %2543 = vmatprep.mubr.bf16.mxu0 0
      %2544 = vmatmul.mubr.bf16.gmra.mxu0 %v2354
      %v2545 = vpop.f32.mrf.mxu0
      %v2546 = vadd.f32 %v2381, %v2545
      %v2547 = vpop.f32.mrf.mxu0
      %v2548 = vpop.f32.mrf.mxu0
      %v2549 = vadd.f32 %v2381, %v2548
      %v2550 = vpop.f32.mrf.mxu0
      %2551 = vmatprep.mubr.bf16.mxu0 0
      %2552 = vmatmul.mubr.bf16.gmra.mxu0 %v2355
      %v2553 = vpop.f32.mrf.mxu0
      %v2554 = vadd.f32 %v2381, %v2553
      %v2555 = vpop.f32.mrf.mxu0
      %v2556 = vpop.f32.mrf.mxu0
      %v2557 = vadd.f32 %v2381, %v2556
      %v2558 = vpop.f32.mrf.mxu0
      %2559 = vmatprep.mubr.bf16.mxu0 0
      %2560 = vmatmul.mubr.bf16.gmra.mxu0 %v2356
      %v2561 = vpop.f32.mrf.mxu0
      %v2562 = vadd.f32 %v2381, %v2561
      %v2563 = vpop.f32.mrf.mxu0
      %v2564 = vpop.f32.mrf.mxu0
      %v2565 = vadd.f32 %v2381, %v2564
      %v2566 = vpop.f32.mrf.mxu0
      %2567 = vmatprep.mubr.bf16.mxu0 0
      %2568 = vmatmul.mubr.bf16.gmra.mxu0 %v2357
      %v2569 = vpop.f32.mrf.mxu0
      %v2570 = vadd.f32 %v2381, %v2569
      %v2571 = vpop.f32.mrf.mxu0
      %v2572 = vpop.f32.mrf.mxu0
      %v2573 = vadd.f32 %v2381, %v2572
      %v2574 = vpop.f32.mrf.mxu0
      %2575 = vmatprep.mubr.bf16.mxu0 0
      %2576 = vmatmul.mubr.bf16.gmra.mxu0 %v2358
      %v2577 = vpop.f32.mrf.mxu0
      %v2578 = vadd.f32 %v2381, %v2577
      %v2579 = vpop.f32.mrf.mxu0
      %v2580 = vpop.f32.mrf.mxu0
      %v2581 = vadd.f32 %v2381, %v2580
      %v2582 = vpop.f32.mrf.mxu0
      %2583 = vmatprep.mubr.bf16.mxu0 0
      %2584 = vmatmul.mubr.bf16.gmra.mxu0 %v2359
      %v2585 = vpop.f32.mrf.mxu0
      %v2586 = vadd.f32 %v2381, %v2585
      %v2587 = vpop.f32.mrf.mxu0
      %v2588 = vpop.f32.mrf.mxu0
      %v2589 = vadd.f32 %v2381, %v2588
      %v2590 = vpop.f32.mrf.mxu0
      %2591 = vdwg.mxu0
      %v2592 = vmax.f32 %v2466, 0.0
      %v2593 = vmax.f32 %v2469, 0.0
      %v2594 = vmax.f32 %v2474, 0.0
      %v2595 = vmax.f32 %v2477, 0.0
      %v2596 = vmax.f32 %v2482, 0.0
      %v2597 = vmax.f32 %v2485, 0.0
      %v2598 = vmax.f32 %v2490, 0.0
      %v2599 = vmax.f32 %v2493, 0.0
      %v2600 = vmax.f32 %v2498, 0.0
      %v2601 = vmax.f32 %v2501, 0.0
      %v2602 = vmax.f32 %v2506, 0.0
      %v2603 = vmax.f32 %v2509, 0.0
      %v2604 = vmax.f32 %v2514, 0.0
      %v2605 = vmax.f32 %v2517, 0.0
      %v2606 = vmax.f32 %v2522, 0.0
      %v2607 = vmax.f32 %v2525, 0.0
      %v2608 = vmax.f32 %v2530, 0.0
      %v2609 = vmax.f32 %v2533, 0.0
      %v2610 = vmax.f32 %v2538, 0.0
      %v2611 = vmax.f32 %v2541, 0.0
      %v2612 = vmax.f32 %v2546, 0.0
      %v2613 = vmax.f32 %v2549, 0.0
      %v2614 = vmax.f32 %v2554, 0.0
      %v2615 = vmax.f32 %v2557, 0.0
      %v2616 = vmax.f32 %v2562, 0.0
      %v2617 = vmax.f32 %v2565, 0.0
      %v2618 = vmax.f32 %v2570, 0.0
      %v2619 = vmax.f32 %v2573, 0.0
      %v2620 = vmax.f32 %v2578, 0.0
      %v2621 = vmax.f32 %v2581, 0.0
      %v2622 = vmax.f32 %v2586, 0.0
      %v2623 = vmax.f32 %v2589, 0.0
      %v2624 = vpack.c.bf16 %v2593, %v2592
      %v2625 = vpack.c.bf16 %v2595, %v2594
      %v2626 = vpack.c.bf16 %v2597, %v2596
      %v2627 = vpack.c.bf16 %v2599, %v2598
      %v2628 = vpack.c.bf16 %v2601, %v2600
      %v2629 = vpack.c.bf16 %v2603, %v2602
      %v2630 = vpack.c.bf16 %v2605, %v2604
      %v2631 = vpack.c.bf16 %v2607, %v2606
      %v2632 = vpack.c.bf16 %v2609, %v2608
      %v2633 = vpack.c.bf16 %v2611, %v2610
      %v2634 = vpack.c.bf16 %v2613, %v2612
      %v2635 = vpack.c.bf16 %v2615, %v2614
      %v2636 = vpack.c.bf16 %v2617, %v2616
      %v2637 = vpack.c.bf16 %v2619, %v2618
      %v2638 = vpack.c.bf16 %v2621, %v2620
      %v2639 = vpack.c.bf16 %v2623, %v2622
      %v2640 = vunpack.c.l.bf16 %v2624
      %v2641 = vunpack.c.h.bf16 %v2624
      %v2642 = vunpack.c.l.bf16 %v2625
      %v2643 = vunpack.c.h.bf16 %v2625
      %v2644 = vunpack.c.l.bf16 %v2626
      %v2645 = vunpack.c.h.bf16 %v2626
      %v2646 = vunpack.c.l.bf16 %v2627
      %v2647 = vunpack.c.h.bf16 %v2627
      %v2648 = vunpack.c.l.bf16 %v2628
      %v2649 = vunpack.c.h.bf16 %v2628
      %v2650 = vunpack.c.l.bf16 %v2629
      %v2651 = vunpack.c.h.bf16 %v2629
      %v2652 = vunpack.c.l.bf16 %v2630
      %v2653 = vunpack.c.h.bf16 %v2630
      %v2654 = vunpack.c.l.bf16 %v2631
      %v2655 = vunpack.c.h.bf16 %v2631
      %v2656 = vunpack.c.l.bf16 %v2632
      %v2657 = vunpack.c.h.bf16 %v2632
      %v2658 = vunpack.c.l.bf16 %v2633
      %v2659 = vunpack.c.h.bf16 %v2633
      %v2660 = vunpack.c.l.bf16 %v2634
      %v2661 = vunpack.c.h.bf16 %v2634
      %v2662 = vunpack.c.l.bf16 %v2635
      %v2663 = vunpack.c.h.bf16 %v2635
      %v2664 = vunpack.c.l.bf16 %v2636
      %v2665 = vunpack.c.h.bf16 %v2636
      %v2666 = vunpack.c.l.bf16 %v2637
      %v2667 = vunpack.c.h.bf16 %v2637
      %v2668 = vunpack.c.l.bf16 %v2638
      %v2669 = vunpack.c.h.bf16 %v2638
      %v2670 = vunpack.c.l.bf16 %v2639
      %v2671 = vunpack.c.h.bf16 %v2639
      %v2672 = vld [vmem:[%s9] sm:$0x1]
      %v2674 = vlaneseq
      %v2675 = vshrl.u32 %v2674, 7
      %v2676 = vsub.s32 0, %v2675
      %v2677 = vrot.slane %v2672, %v2676
      %v2679 = vmul.f32 %v2640, %v2677
      %v2680 = vmul.f32 %v2641, %v2677
      %v2681 = vmul.f32 %v2642, %v2677
      %v2682 = vmul.f32 %v2643, %v2677
      %v2683 = vmul.f32 %v2644, %v2677
      %v2684 = vmul.f32 %v2645, %v2677
      %v2685 = vmul.f32 %v2646, %v2677
      %v2686 = vmul.f32 %v2647, %v2677
      %v2687 = vmul.f32 %v2648, %v2677
      %v2688 = vmul.f32 %v2649, %v2677
      %v2689 = vmul.f32 %v2650, %v2677
      %v2690 = vmul.f32 %v2651, %v2677
      %v2691 = vmul.f32 %v2652, %v2677
      %v2692 = vmul.f32 %v2653, %v2677
      %v2693 = vmul.f32 %v2654, %v2677
      %v2694 = vmul.f32 %v2655, %v2677
      %v2695 = vmul.f32 %v2656, %v2677
      %v2696 = vmul.f32 %v2657, %v2677
      %v2697 = vmul.f32 %v2658, %v2677
      %v2698 = vmul.f32 %v2659, %v2677
      %v2699 = vmul.f32 %v2660, %v2677
      %v2700 = vmul.f32 %v2661, %v2677
      %v2701 = vmul.f32 %v2662, %v2677
      %v2702 = vmul.f32 %v2663, %v2677
      %v2703 = vmul.f32 %v2664, %v2677
      %v2704 = vmul.f32 %v2665, %v2677
      %v2705 = vmul.f32 %v2666, %v2677
      %v2706 = vmul.f32 %v2667, %v2677
      %v2707 = vmul.f32 %v2668, %v2677
      %v2708 = vmul.f32 %v2669, %v2677
      %v2709 = vmul.f32 %v2670, %v2677
      %v2710 = vmul.f32 %v2671, %v2677
      %vm2711 = vcmask 523264
      %v2712 = vsel %vm2711, %v2679, 0.0
      %2713 = vadd.xlane.f32.xlu0 %v2712
      %v2714 = vpop.xlane.xlu0 %2713
      %v2715 = vsel %vm2711, %v2680, 0.0
      %2716 = vadd.xlane.f32.xlu0 %v2715
      %v2717 = vpop.xlane.xlu0 %2716
      %v2718 = vsel %vm2711, %v2681, 0.0
      %2719 = vadd.xlane.f32.xlu0 %v2718
      %v2720 = vpop.xlane.xlu0 %2719
      %v2721 = vsel %vm2711, %v2682, 0.0
      %2722 = vadd.xlane.f32.xlu0 %v2721
      %v2723 = vpop.xlane.xlu0 %2722
      %v2724 = vsel %vm2711, %v2683, 0.0
      %2725 = vadd.xlane.f32.xlu0 %v2724
      %v2726 = vpop.xlane.xlu0 %2725
      %v2727 = vsel %vm2711, %v2684, 0.0
      %2728 = vadd.xlane.f32.xlu0 %v2727
      %v2729 = vpop.xlane.xlu0 %2728
      %v2730 = vsel %vm2711, %v2685, 0.0
      %2731 = vadd.xlane.f32.xlu0 %v2730
      %v2732 = vpop.xlane.xlu0 %2731
      %v2733 = vsel %vm2711, %v2686, 0.0
      %2734 = vadd.xlane.f32.xlu0 %v2733
      %v2735 = vpop.xlane.xlu0 %2734
      %v2736 = vsel %vm2711, %v2687, 0.0
      %2737 = vadd.xlane.f32.xlu0 %v2736
      %v2738 = vpop.xlane.xlu0 %2737
      %v2739 = vsel %vm2711, %v2688, 0.0
      %2740 = vadd.xlane.f32.xlu0 %v2739
      %v2741 = vpop.xlane.xlu0 %2740
      %v2742 = vsel %vm2711, %v2689, 0.0
      %2743 = vadd.xlane.f32.xlu0 %v2742
      %v2744 = vpop.xlane.xlu0 %2743
      %v2745 = vsel %vm2711, %v2690, 0.0
      %2746 = vadd.xlane.f32.xlu0 %v2745
      %v2747 = vpop.xlane.xlu0 %2746
      %v2748 = vsel %vm2711, %v2691, 0.0
      %2749 = vadd.xlane.f32.xlu0 %v2748
      %v2750 = vpop.xlane.xlu0 %2749
      %v2751 = vsel %vm2711, %v2692, 0.0
      %2752 = vadd.xlane.f32.xlu0 %v2751
      %v2753 = vpop.xlane.xlu0 %2752
      %v2754 = vsel %vm2711, %v2693, 0.0
      %2755 = vadd.xlane.f32.xlu0 %v2754
      %v2756 = vpop.xlane.xlu0 %2755
      %v2757 = vsel %vm2711, %v2694, 0.0
      %2758 = vadd.xlane.f32.xlu0 %v2757
      %v2759 = vpop.xlane.xlu0 %2758
      %v2760 = vsel %vm2711, %v2695, 0.0
      %2761 = vadd.xlane.f32.xlu0 %v2760
      %v2762 = vpop.xlane.xlu0 %2761
      %v2763 = vsel %vm2711, %v2696, 0.0
      %2764 = vadd.xlane.f32.xlu0 %v2763
      %v2765 = vpop.xlane.xlu0 %2764
      %v2766 = vsel %vm2711, %v2697, 0.0
      %2767 = vadd.xlane.f32.xlu0 %v2766
      %v2768 = vpop.xlane.xlu0 %2767
      %v2769 = vsel %vm2711, %v2698, 0.0
      %2770 = vadd.xlane.f32.xlu0 %v2769
      %v2771 = vpop.xlane.xlu0 %2770
      %v2772 = vsel %vm2711, %v2699, 0.0
      %2773 = vadd.xlane.f32.xlu0 %v2772
      %v2774 = vpop.xlane.xlu0 %2773
      %v2775 = vsel %vm2711, %v2700, 0.0
      %2776 = vadd.xlane.f32.xlu0 %v2775
      %v2777 = vpop.xlane.xlu0 %2776
      %v2778 = vsel %vm2711, %v2701, 0.0
      %2779 = vadd.xlane.f32.xlu0 %v2778
      %v2780 = vpop.xlane.xlu0 %2779
      %v2781 = vsel %vm2711, %v2702, 0.0
      %2782 = vadd.xlane.f32.xlu0 %v2781
      %v2783 = vpop.xlane.xlu0 %2782
      %v2784 = vsel %vm2711, %v2703, 0.0
      %2785 = vadd.xlane.f32.xlu0 %v2784
      %v2786 = vpop.xlane.xlu0 %2785
      %v2787 = vsel %vm2711, %v2704, 0.0
      %2788 = vadd.xlane.f32.xlu0 %v2787
      %v2789 = vpop.xlane.xlu0 %2788
      %v2790 = vsel %vm2711, %v2705, 0.0
      %2791 = vadd.xlane.f32.xlu0 %v2790
      %v2792 = vpop.xlane.xlu0 %2791
      %v2793 = vsel %vm2711, %v2706, 0.0
      %2794 = vadd.xlane.f32.xlu0 %v2793
      %v2795 = vpop.xlane.xlu0 %2794
      %v2796 = vsel %vm2711, %v2707, 0.0
      %2797 = vadd.xlane.f32.xlu0 %v2796
      %v2798 = vpop.xlane.xlu0 %2797
      %v2799 = vsel %vm2711, %v2708, 0.0
      %2800 = vadd.xlane.f32.xlu0 %v2799
      %v2801 = vpop.xlane.xlu0 %2800
      %v2802 = vsel %vm2711, %v2709, 0.0
      %2803 = vadd.xlane.f32.xlu0 %v2802
      %v2804 = vpop.xlane.xlu0 %2803
      %v2805 = vsel %vm2711, %v2710, 0.0
      %2806 = vadd.xlane.f32.xlu0 %v2805
      %v2807 = vpop.xlane.xlu0 %2806
      %v2808 = vld [vmem:[#allocation2] sm:$0x1]
      %v2810 = vlaneseq
      %v2811 = vshrl.u32 %v2810, 7
      %v2812 = vsub.s32 0, %v2811
      %v2813 = vrot.slane %v2808, %v2812
      %v2815 = vadd.f32 %v2714, %v2813
      %v2816 = vadd.f32 %v2717, %v2813
      %v2817 = vadd.f32 %v2720, %v2813
      %v2818 = vadd.f32 %v2723, %v2813
      %v2819 = vadd.f32 %v2726, %v2813
      %v2820 = vadd.f32 %v2729, %v2813
      %v2821 = vadd.f32 %v2732, %v2813
      %v2822 = vadd.f32 %v2735, %v2813
      %v2823 = vadd.f32 %v2738, %v2813
      %v2824 = vadd.f32 %v2741, %v2813
      %v2825 = vadd.f32 %v2744, %v2813
      %v2826 = vadd.f32 %v2747, %v2813
      %v2827 = vadd.f32 %v2750, %v2813
      %v2828 = vadd.f32 %v2753, %v2813
      %v2829 = vadd.f32 %v2756, %v2813
      %v2830 = vadd.f32 %v2759, %v2813
      %v2831 = vadd.f32 %v2762, %v2813
      %v2832 = vadd.f32 %v2765, %v2813
      %v2833 = vadd.f32 %v2768, %v2813
      %v2834 = vadd.f32 %v2771, %v2813
      %v2835 = vadd.f32 %v2774, %v2813
      %v2836 = vadd.f32 %v2777, %v2813
      %v2837 = vadd.f32 %v2780, %v2813
      %v2838 = vadd.f32 %v2783, %v2813
      %v2839 = vadd.f32 %v2786, %v2813
      %v2840 = vadd.f32 %v2789, %v2813
      %v2841 = vadd.f32 %v2792, %v2813
      %v2842 = vadd.f32 %v2795, %v2813
      %v2843 = vadd.f32 %v2798, %v2813
      %v2844 = vadd.f32 %v2801, %v2813
      %v2845 = vadd.f32 %v2804, %v2813
      %v2846 = vadd.f32 %v2807, %v2813
      %vm2847 = vcmask 7168
      %2848 = vst.msk [vmem:[%s390] sm:$0xff] %vm2847, %v2815
      %2849 = vst.msk [vmem:[%s390 + $0x8] sm:$0xff] %vm2847, %v2816
      %2850 = vst.msk [vmem:[%s390 + $0x10] sm:$0xff] %vm2847, %v2817
      %2851 = vst.msk [vmem:[%s390 + $0x18] sm:$0xff] %vm2847, %v2818
      %2852 = vst.msk [vmem:[%s390 + $0x20] sm:$0xff] %vm2847, %v2819
      %2853 = vst.msk [vmem:[%s390 + $0x28] sm:$0xff] %vm2847, %v2820
      %2854 = vst.msk [vmem:[%s390 + $0x30] sm:$0xff] %vm2847, %v2821
      %2855 = vst.msk [vmem:[%s390 + $0x38] sm:$0xff] %vm2847, %v2822
      %2856 = vst.msk [vmem:[%s390 + $0x40] sm:$0xff] %vm2847, %v2823
      %2857 = vst.msk [vmem:[%s390 + $0x48] sm:$0xff] %vm2847, %v2824
      %2858 = vst.msk [vmem:[%s390 + $0x50] sm:$0xff] %vm2847, %v2825
      %2859 = vst.msk [vmem:[%s390 + $0x58] sm:$0xff] %vm2847, %v2826
      %2860 = vst.msk [vmem:[%s390 + $0x60] sm:$0xff] %vm2847, %v2827
      %2861 = vst.msk [vmem:[%s390 + $0x68] sm:$0xff] %vm2847, %v2828
      %2862 = vst.msk [vmem:[%s390 + $0x70] sm:$0xff] %vm2847, %v2829
      %2863 = vst.msk [vmem:[%s390 + $0x78] sm:$0xff] %vm2847, %v2830
      %2864 = vst.msk [vmem:[%s390 + $0x80] sm:$0xff] %vm2847, %v2831
      %2865 = vst.msk [vmem:[%s390 + $0x88] sm:$0xff] %vm2847, %v2832
      %2866 = vst.msk [vmem:[%s390 + $0x90] sm:$0xff] %vm2847, %v2833
      %2867 = vst.msk [vmem:[%s390 + $0x98] sm:$0xff] %vm2847, %v2834
      %2868 = vst.msk [vmem:[%s390 + $0xa0] sm:$0xff] %vm2847, %v2835
      %2869 = vst.msk [vmem:[%s390 + $0xa8] sm:$0xff] %vm2847, %v2836
      %2870 = vst.msk [vmem:[%s390 + $0xb0] sm:$0xff] %vm2847, %v2837
      %2871 = vst.msk [vmem:[%s390 + $0xb8] sm:$0xff] %vm2847, %v2838
      %2872 = vst.msk [vmem:[%s390 + $0xc0] sm:$0xff] %vm2847, %v2839
      %2873 = vst.msk [vmem:[%s390 + $0xc8] sm:$0xff] %vm2847, %v2840
      %2874 = vst.msk [vmem:[%s390 + $0xd0] sm:$0xff] %vm2847, %v2841
      %2875 = vst.msk [vmem:[%s390 + $0xd8] sm:$0xff] %vm2847, %v2842
      %2876 = vst.msk [vmem:[%s390 + $0xe0] sm:$0xff] %vm2847, %v2843
      %2877 = vst.msk [vmem:[%s390 + $0xe8] sm:$0xff] %vm2847, %v2844
      %2878 = vst.msk [vmem:[%s390 + $0xf0] sm:$0xff] %vm2847, %v2845
      %2879 = vst.msk [vmem:[%s390 + $0xf8] sm:$0xff] %vm2847, %v2846
      %s2880 = smul.u32 32, %s24
      %p2881 = scmp.lt.s32.totalorder %s2880, 63
      %s2882 = scalar_select %p2881, %s2880, 63
      %s2883 = smul.addr %s2882, 8
      %s2884 = scalar_lea.vmem %s11, %s2883
      // Predicated region
      $region65: #{tpu_custom_call.1} parent=63 // pred_check
        %p2885 = pneg %p278
      $region66: #{tpu_custom_call.1} parent=63 // pred_check_branch
        %2887 = sbr.rel (%p2885) target = $region68
      $region67: #{tpu_custom_call.1} parent=63 // pred_region
        %s2888 = smul.u32 32, %s24
      $region68: #{tpu_custom_call.1} parent=63 // pred_fallthru
        _
    $region64: #{tpu_custom_call.1} parent=5 // pred_fallthru
      _
    %p2889 = scmp.le.s32.totalorder 2, %s19
    // Predicated region
    $region69: #{tpu_custom_call.1} parent=5 // pred_check
      %p2890 = pneg %p2889
    $region70: #{tpu_custom_call.1} parent=5 // pred_check_branch
      %2892 = sbr.rel (%p2890) target = $region72
    $region71: #{tpu_custom_call.1} parent=5 // pred_region
      %s2893 = ssub.s32 %s19, 2
      // Predicated region
      $region73: #{tpu_custom_call.1} parent=71 // pred_check
        %p2894 = pneg %p284
      $region74: #{tpu_custom_call.1} parent=71 // pred_check_branch
        %2896 = sbr.rel (%p2894) target = $region76
      $region75: #{tpu_custom_call.1} parent=71 // pred_region
        %s2897 = smul.u32 32, %s25
        %p2898 = scmp.lt.s32.totalorder %s2897, 63
        %s2899 = scalar_select %p2898, %s2897, 63
        %s2900 = smul.addr %s2899, 8
        %s2901 = scalar_lea.vmem %s11, %s2900
      $region76: #{tpu_custom_call.1} parent=71 // pred_fallthru
        _
    $region72: #{tpu_custom_call.1} parent=5 // pred_fallthru
      _
  $region6: #{tpu_custom_call.1} parent=0 // loop_footer
    %s23 = sadd.s32 1, %s19
  $region7: #{tpu_custom_call.1} parent=0 // loop_footer_branch
    %18 = sbr.rel target = $region3
  $region8: #{tpu_custom_call.1} parent=0 // loop_exit
    _

</llo_original>
